<compile_context>
chip_gen: v5e
topology: v5e:2x2
jax: 0.10.0
libtpu: 0.0.40
codegen_flags: <defaults>
</compile_context>

<pallas_src>
import functools

import jax
import jax.numpy as jnp
from jax.experimental import pallas as pl
from jax.experimental.pallas import tpu as pltpu


def _round_up(x, m):
    return (x + m - 1) // m * m


def simclr_kernel(x_ref, wboth_ref, w1_ref, b1_ref, w2_ref, b2_ref, o_ref, acc_ref,
                  *, inv_hw):
    """One (group-block) x (spatial tile) step.

    x_ref:     (GB, C, TILE_S)      bf16  channel-major spatial tile for GB images
    wboth_ref: (2*INDIM_P, C)       bf16  rows [:INDIM_P]  = conv wc^T (view 1)
                                          rows [INDIM_P:]  = grayscale-folded conv (view 2)
    w1_ref:    (INDIM_P, 512)       bf16  l1 weights (rows zero-padded past indim)
    b1_ref:    (1, 512)             f32
    w2_ref:    (512, 128)           bf16  l2 weights
    b2_ref:    (1, 128)             f32
    o_ref:     (2, GB, 128)         f32   [view, group-in-block, proj]
    acc_ref:   (GB, 2*INDIM_P)      f32   pooled-sum accumulator [view1 | view2] lanes
    """
    t = pl.program_id(1)

    @pl.when(t == 0)
    def _init():
        acc_ref[...] = jnp.zeros_like(acc_ref)

    gb, c, _ = x_ref.shape
    d2 = wboth_ref.shape[0]            # 2 * INDIM_P
    indim_p = w1_ref.shape[0]

    # --- stand-in big_cnn: 1x1 conv + ReLU for BOTH views, bf16 fed straight to the MXU.
    x = x_ref[...]                                                   # (gb, C, T) bf16
    wb = jnp.broadcast_to(wboth_ref[...][None], (gb, d2, c))         # tiny (gb, d2, C) bf16
    h = jnp.einsum('gdc,gct->gdt', wb, x,
                   preferred_element_type=jnp.float32)               # (gb, d2, T) f32
    h = jnp.maximum(h, 0.0)

    # --- partial global-average-pool: lane-axis reduce, f32 accumulate.
    acc_ref[...] += jnp.sum(h, axis=-1)                              # (gb, d2)

    # --- projection head: once per group block, batched over 2*gb rows.
    @pl.when(t == pl.num_programs(1) - 1)
    def _finalize():
        rep = (acc_ref[...] * inv_hw).astype(jnp.bfloat16)           # (gb, d2)
        # split [view1 | view2] lane halves and stack along rows -> one 2*gb-row matmul
        rep2 = jnp.concatenate([rep[:, :indim_p], rep[:, indim_p:]], axis=0)  # (2*gb, indim_p)
        z1 = jnp.dot(rep2, w1_ref[...],
                     preferred_element_type=jnp.float32) + b1_ref[...]
        z1 = jnp.maximum(z1, 0.0)
        out = jnp.dot(z1.astype(jnp.bfloat16), w2_ref[...],
                      preferred_element_type=jnp.float32) + b2_ref[...]       # (2*gb, 128)
        o_ref[0] = out[:gb].astype(o_ref.dtype)
        o_ref[1] = out[gb:].astype(o_ref.dtype)


def _pick_gb(batch):
    """Groups per grid step: >= 8 when possible (head MXU utilization), divisor of B,
    and either a multiple of 8 or the full batch (8,128-tiling rule for the out block)."""
    if batch <= 8:
        return batch
    for cand in (8, 16):
        if batch % cand == 0:
            return cand
    return batch


def _pick_tile_s(hw, gb, indim_p, budget_bytes=8 * 1024 * 1024):
    """Largest clean divisor of H*W whose f32 conv intermediate (gb, 2*indim_p, tile_s)
    stays under `budget_bytes` (the VMEM-limiting term, v7x-safe)."""
    cap = max(128, budget_bytes // (gb * 2 * indim_p * 4))
    for cand in (8192, 4096, 2048, 1024, 512, 256, 128):
        if cand <= cap and cand <= hw and hw % cand == 0:
            return cand
    return hw


def simclr_heads(x_cm, wboth, w1_p, b1, w2, b2, *, gb, tile_s):
    """x_cm: (B, C, H*W) bf16 channel-major.  Returns (2, B, 128) f32 [view, batch, proj]."""
    B, C, HW = x_cm.shape
    d2 = wboth.shape[0]
    indim_p = w1_p.shape[0]
    assert d2 == 2 * indim_p
    assert B % gb == 0 and HW % tile_s == 0
    n_tiles = HW // tile_s

    flops = 2 * B * HW * C * d2 + 2 * (2 * B) * (indim_p * 512 + 512 * 128)
    bytes_accessed = int(
        sum(int(a.size) * a.dtype.itemsize for a in (x_cm, wboth, w1_p, b1, w2, b2))
        + 2 * B * 128 * 4)

    kern = functools.partial(simclr_kernel, inv_hw=1.0 / float(HW))

    return pl.pallas_call(
        kern,
        out_shape=jax.ShapeDtypeStruct((2, B, 128), jnp.float32),
        grid_spec=pltpu.PrefetchScalarGridSpec(
            num_scalar_prefetch=0,
            grid=(B // gb, n_tiles),
            in_specs=[
                # streamed x tiles (double-buffered by the Pallas pipeline), lane-dense
                pl.BlockSpec((gb, C, tile_s), lambda g, t: (g, 0, t)),
                # weights/biases: constant index_maps -> DMA'd once, stay VMEM-resident
                pl.BlockSpec((d2, C), lambda g, t: (0, 0)),
                pl.BlockSpec((indim_p, 512), lambda g, t: (0, 0)),
                pl.BlockSpec((1, 512), lambda g, t: (0, 0)),
                pl.BlockSpec((512, 128), lambda g, t: (0, 0)),
                pl.BlockSpec((1, 128), lambda g, t: (0, 0)),
            ],
            out_specs=pl.BlockSpec((2, gb, 128), lambda g, t: (0, g, 0)),
            scratch_shapes=[pltpu.VMEM((gb, d2), jnp.float32)],
        ),
        compiler_params=pltpu.CompilerParams(
            dimension_semantics=("parallel", "arbitrary"),
            vmem_limit_bytes=32 * 1024 * 1024,
        ),
        cost_estimate=pl.CostEstimate(flops=flops, transcendentals=0,
                                      bytes_accessed=bytes_accessed),
    )(x_cm, wboth, w1_p, b1, w2, b2)


def simclr_forward(x_nhwc, params, *, tile_s=None, gb=None):
    """x_nhwc: (B, H, W, C) f32. Returns (proj1, proj2), each (B, 128) f32."""
    B, H, W, C = x_nhwc.shape
    wc, w1, b1, w2, b2 = params
    indim = wc.shape[1]
    indim_p = _round_up(indim, 128)

    # TODO(synk): torchvision RandomChoice augmentations have no Pallas equivalent;
    # deterministic stand-ins: view1 = identity, view2 = grayscale (channel mean).
    # The grayscale view is folded into the conv weights (exact for a 1x1 conv), so only
    # the original image is streamed from HBM.

    # lane-dense channel-major activations: (B, C, H*W) bf16
    x_cm = jnp.transpose(x_nhwc, (0, 3, 1, 2)).reshape(B, C, H * W).astype(jnp.bfloat16)

    # conv weights: wc^T zero-padded to 128 features; rows [indim_p:) = grayscale fold
    wc_t = jnp.pad(wc, ((0, 0), (0, indim_p - indim))).T                       # (indim_p, C)
    w_gray = jnp.broadcast_to(jnp.mean(wc_t, axis=1, keepdims=True), wc_t.shape)
    wboth = jnp.concatenate([wc_t, w_gray], axis=0).astype(jnp.bfloat16)       # (2*indim_p, C)

    w1_p = jnp.pad(w1, ((0, indim_p - indim), (0, 0))).astype(jnp.bfloat16)

    if gb is None:
        gb = _pick_gb(B)
    if tile_s is None:
        tile_s = _pick_tile_s(H * W, gb, indim_p)

    out = simclr_heads(x_cm, wboth, w1_p, b1, w2.astype(jnp.bfloat16), b2,
                       gb=gb, tile_s=tile_s)                     # (2, B, 128) f32
    return out[0], out[1]


def simclr_reference(x_nhwc, params):
    """Pure-JAX reference with matching bf16 rounding points (for the correctness check)."""
    B, H, W, C = x_nhwc.shape
    wc, w1, b1, w2, b2 = params
    x1 = x_nhwc
    x2 = jnp.broadcast_to(jnp.mean(x_nhwc, axis=-1, keepdims=True), x_nhwc.shape)

    def branch(x):
        xb = x.reshape(B, H * W, C).astype(jnp.bfloat16)
        h = jnp.maximum(
            jnp.einsum('bsc,cd->bsd', xb, wc.astype(jnp.bfloat16),
                       preferred_element_type=jnp.float32), 0.0)
        rep = jnp.mean(h, axis=1)
        z1 = jnp.maximum(
            jnp.dot(rep.astype(jnp.bfloat16), w1.astype(jnp.bfloat16),
                    preferred_element_type=jnp.float32) + b1, 0.0)
        return jnp.dot(z1.astype(jnp.bfloat16), w2.astype(jnp.bfloat16),
                       preferred_element_type=jnp.float32) + b2

    return branch(x1), branch(x2)


def init_params(key, C, indim):
    """Deterministic PyTorch-style uniform(+-1/sqrt(fan_in)) init."""
    k_c, k1w, k1b, k2w, k2b = jax.random.split(key, 5)

    def lin(kw, kb, fan_in, fan_out):
        bound = 1.0 / jnp.sqrt(fan_in)
        w = jax.random.uniform(kw, (fan_in, fan_out), jnp.float32, -bound, bound)
        b = jax.random.uniform(kb, (1, fan_out), jnp.float32, -bound, bound)
        return w, b

    wc = jax.random.uniform(k_c, (C, indim), jnp.float32,
                            -1.0 / jnp.sqrt(C), 1.0 / jnp.sqrt(C))
    w1, b1 = lin(k1w, k1b, indim, 512)   # l1 = nn.Linear(indim, 512)
    w2, b2 = lin(k2w, k2b, 512, 128)     # l2 = nn.Linear(512, 128)
    return wc, w1, b1, w2, b2


if __name__ == "__main__":
    key = jax.random.PRNGKey(0)
    k_x, k_p = jax.random.split(key)

    B, H, W, C = 2, 16, 16, 4   # image_size = 16
    indim = 64                  # feature dim produced by the stand-in big_cnn

    x = jax.random.normal(k_x, (B, H, W, C), dtype=jnp.float32)
    params = init_params(k_p, C, indim)

    # tile_s=128 -> 2 spatial tiles per image, exercising the grid-reduction path
    proj1, proj2 = simclr_forward(x, params, tile_s=128)
    jax.block_until_ready((proj1, proj2))

    assert proj1.shape == (B, 128) and proj2.shape == (B, 128)
    assert proj1.dtype == jnp.float32 and proj2.dtype == jnp.float32

    r1, r2 = simclr_reference(x, params)
    assert jnp.allclose(proj1, r1, rtol=5e-2, atol=5e-2)
    assert jnp.allclose(proj2, r2, rtol=5e-2, atol=5e-2)

    print("KERNEL_OK")
</pallas_src>

<mosaic_0001>
module attributes {stable_mosaic.version = 11 : i64} {
  func.func @simclr_kernel(%arg0: i32, %arg1: i32, %arg2: memref<2x4x128xbf16, #tpu.memory_space<vmem>>, %arg3: memref<256x4xbf16, #tpu.memory_space<vmem>>, %arg4: memref<128x512xbf16, #tpu.memory_space<vmem>>, %arg5: memref<1x512xf32, #tpu.memory_space<vmem>>, %arg6: memref<512x128xbf16, #tpu.memory_space<vmem>>, %arg7: memref<1x128xf32, #tpu.memory_space<vmem>>, %arg8: memref<2x2x128xf32, #tpu.memory_space<vmem>>, %arg9: memref<2x256xf32, #tpu.memory_space<vmem>>) attributes {dimension_semantics = [#tpu.dimension_semantics<parallel>, #tpu.dimension_semantics<arbitrary>], iteration_bounds = array<i64: 1, 2>, scalar_prefetch = 0 : i64, scratch_operands = 1 : i64, tpu.core_type = #tpu.core_type<tc>, window_params = [{transform_indices = @transform_0, window_bounds = array<i64: 2, 4, 128>}, {pipeline_mode = #tpu.pipeline_mode<synchronous>, transform_indices = @transform_1, window_bounds = array<i64: 256, 4>}, {pipeline_mode = #tpu.pipeline_mode<synchronous>, transform_indices = @transform_2, window_bounds = array<i64: 128, 512>}, {pipeline_mode = #tpu.pipeline_mode<synchronous>, transform_indices = @transform_3, window_bounds = array<i64: 1, 512>}, {pipeline_mode = #tpu.pipeline_mode<synchronous>, transform_indices = @transform_4, window_bounds = array<i64: 512, 128>}, {pipeline_mode = #tpu.pipeline_mode<synchronous>, transform_indices = @transform_5, window_bounds = array<i64: 1, 128>}, {transform_indices = @transform_6, window_bounds = array<i64: 2, 2, 128>}]} {
    %c0_i32 = arith.constant 0 : i32
    %0 = arith.cmpi eq, %arg1, %c0_i32 : i32
    %1 = arith.extui %0 : i1 to i32
    %c0_i32_0 = arith.constant 0 : i32
    %2 = arith.cmpi ne, %1, %c0_i32_0 : i32
    scf.if %2 {
      %cst_12 = arith.constant 0.000000e+00 : f32
      %18 = vector.broadcast %cst_12 : f32 to vector<2x256xf32>
      %c0_13 = arith.constant 0 : index
      %c0_14 = arith.constant 0 : index
      %19 = vector.load %arg9[%c0_13, %c0_14] : memref<2x256xf32, #tpu.memory_space<vmem>>, vector<2x256xf32>
      tpu.vector_store %arg9[%c0_13, %c0_14], %18 {strides = array<i32>} : memref<2x256xf32, #tpu.memory_space<vmem>>, vector<2x256xf32>,
    } else {
    }
    %c0 = arith.constant 0 : index
    %c0_1 = arith.constant 0 : index
    %c0_2 = arith.constant 0 : index
    %3 = vector.load %arg2[%c0, %c0_1, %c0_2] : memref<2x4x128xbf16, #tpu.memory_space<vmem>>, vector<2x4x128xbf16>
    %c0_3 = arith.constant 0 : index
    %c0_4 = arith.constant 0 : index
    %4 = vector.load %arg3[%c0_3, %c0_4] : memref<256x4xbf16, #tpu.memory_space<vmem>>, vector<256x4xbf16>
    %5 = vector.shape_cast %4 : vector<256x4xbf16> to vector<1x256x4xbf16>
    %6 = vector.shape_cast %5 : vector<1x256x4xbf16> to vector<1x256x4xbf16>
    %7 = vector.broadcast %6 : vector<1x256x4xbf16> to vector<2x256x4xbf16>
    "tpu.trace_start"() <{level = 10 : i32, message = "gdc,gct->gdt"}> : () -> ()
    %cst = arith.constant dense<0.000000e+00> : vector<2x256x128xf32>
    %8 = tpu.matmul %7, %3, %cst {dimension_numbers = #tpu.dot_dimension_numbers<[2], [1], [1], [2], [0, 0, 0, 1, 1, 2], [0], [0]>} : vector<2x256x4xbf16>, vector<2x4x128xbf16>, vector<2x256x128xf32> -> vector<2x256x128xf32>
    "tpu.trace_stop"() : () -> ()
    %cst_5 = arith.constant 0.000000e+00 : f32
    %9 = vector.broadcast %cst_5 : f32 to vector<2x256x128xf32>
    %10 = arith.maximumf %8, %9 : vector<2x256x128xf32>
    %c0_6 = arith.constant 0 : index
    %c0_7 = arith.constant 0 : index
    %11 = vector.load %arg9[%c0_6, %c0_7] : memref<2x256xf32, #tpu.memory_space<vmem>>, vector<2x256xf32>
    %cst_8 = arith.constant dense<0.000000e+00> : vector<2x256xf32>
    %12 = vector.multi_reduction <add>, %10, %cst_8 [2] : vector<2x256x128xf32> to vector<2x256xf32>
    %13 = arith.addf %11, %12 : vector<2x256xf32>
    %c0_9 = arith.constant 0 : index
    %c0_10 = arith.constant 0 : index
    %14 = vector.load %arg9[%c0_9, %c0_10] : memref<2x256xf32, #tpu.memory_space<vmem>>, vector<2x256xf32>
    tpu.vector_store %arg9[%c0_9, %c0_10], %13 {strides = array<i32>} : memref<2x256xf32, #tpu.memory_space<vmem>>, vector<2x256xf32>,
    %c1_i32 = arith.constant 1 : i32
    %15 = arith.cmpi eq, %arg1, %c1_i32 : i32
    %16 = arith.extui %15 : i1 to i32
    %c0_i32_11 = arith.constant 0 : i32
    %17 = arith.cmpi ne, %16, %c0_i32_11 : i32
    scf.if %17 {
      %c0_12 = arith.constant 0 : index
      %c0_13 = arith.constant 0 : index
      %18 = vector.load %arg9[%c0_12, %c0_13] : memref<2x256xf32, #tpu.memory_space<vmem>>, vector<2x256xf32>
      %cst_14 = arith.constant 3.906250e-03 : f32
      %19 = vector.broadcast %cst_14 : f32 to vector<2x256xf32>
      %20 = arith.mulf %18, %19 : vector<2x256xf32>
      %21 = arith.truncf %20 : vector<2x256xf32> to vector<2x256xbf16>
      %22 = vector.extract_strided_slice %21 {offsets = [0, 0], sizes = [2, 128], strides = [1, 1]} : vector<2x256xbf16> to vector<2x128xbf16>
      %23 = vector.extract_strided_slice %21 {offsets = [0, 128], sizes = [2, 128], strides = [1, 1]} : vector<2x256xbf16> to vector<2x128xbf16>
      %24 = tpu.concatenate %22, %23 in 0 : vector<2x128xbf16>, vector<2x128xbf16> -> vector<4x128xbf16>
      %c0_15 = arith.constant 0 : index
      %c0_16 = arith.constant 0 : index
      %25 = vector.load %arg4[%c0_15, %c0_16] : memref<128x512xbf16, #tpu.memory_space<vmem>>, vector<128x512xbf16>
      %cst_17 = arith.constant dense<0.000000e+00> : vector<4x512xf32>
      %26 = tpu.matmul %24, %25, %cst_17 {dimension_numbers = #tpu.dot_dimension_numbers<[1], [0], [0], [1], [0, 0, 1, 1], [], []>} : vector<4x128xbf16>, vector<128x512xbf16>, vector<4x512xf32> -> vector<4x512xf32>
      %c0_18 = arith.constant 0 : index
      %c0_19 = arith.constant 0 : index
      %27 = vector.load %arg5[%c0_18, %c0_19] : memref<1x512xf32, #tpu.memory_space<vmem>>, vector<1x512xf32>
      %28 = vector.broadcast %27 : vector<1x512xf32> to vector<4x512xf32>
      %29 = arith.addf %26, %28 : vector<4x512xf32>
      %cst_20 = arith.constant 0.000000e+00 : f32
      %30 = vector.broadcast %cst_20 : f32 to vector<4x512xf32>
      %31 = arith.maximumf %29, %30 : vector<4x512xf32>
      %32 = arith.truncf %31 : vector<4x512xf32> to vector<4x512xbf16>
      %c0_21 = arith.constant 0 : index
      %c0_22 = arith.constant 0 : index
      %33 = vector.load %arg6[%c0_21, %c0_22] : memref<512x128xbf16, #tpu.memory_space<vmem>>, vector<512x128xbf16>
      %cst_23 = arith.constant dense<0.000000e+00> : vector<4x128xf32>
      %34 = tpu.matmul %32, %33, %cst_23 {dimension_numbers = #tpu.dot_dimension_numbers<[1], [0], [0], [1], [0, 0, 1, 1], [], []>} : vector<4x512xbf16>, vector<512x128xbf16>, vector<4x128xf32> -> vector<4x128xf32>
      %c0_24 = arith.constant 0 : index
      %c0_25 = arith.constant 0 : index
      %35 = vector.load %arg7[%c0_24, %c0_25] : memref<1x128xf32, #tpu.memory_space<vmem>>, vector<1x128xf32>
      %36 = vector.broadcast %35 : vector<1x128xf32> to vector<4x128xf32>
      %37 = arith.addf %34, %36 : vector<4x128xf32>
      %38 = vector.extract_strided_slice %37 {offsets = [0, 0], sizes = [2, 128], strides = [1, 1]} : vector<4x128xf32> to vector<2x128xf32>
      %c0_26 = arith.constant 0 : index
      %c0_27 = arith.constant 0 : index
      %c0_28 = arith.constant 0 : index
      %39 = vector.load %arg8[%c0_26, %c0_27, %c0_28] : memref<2x2x128xf32, #tpu.memory_space<vmem>>, vector<1x2x128xf32>
      %40 = vector.shape_cast %39 : vector<1x2x128xf32> to vector<2x128xf32>
      %41 = vector.shape_cast %38 : vector<2x128xf32> to vector<1x2x128xf32>
      tpu.vector_store %arg8[%c0_26, %c0_27, %c0_28], %41 {strides = array<i32>} : memref<2x2x128xf32, #tpu.memory_space<vmem>>, vector<1x2x128xf32>,
      %42 = vector.extract_strided_slice %37 {offsets = [2, 0], sizes = [2, 128], strides = [1, 1]} : vector<4x128xf32> to vector<2x128xf32>
      %c1 = arith.constant 1 : index
      %c0_29 = arith.constant 0 : index
      %c0_30 = arith.constant 0 : index
      %43 = vector.load %arg8[%c1, %c0_29, %c0_30] : memref<2x2x128xf32, #tpu.memory_space<vmem>>, vector<1x2x128xf32>
      %44 = vector.shape_cast %43 : vector<1x2x128xf32> to vector<2x128xf32>
      %45 = vector.shape_cast %42 : vector<2x128xf32> to vector<1x2x128xf32>
      tpu.vector_store %arg8[%c1, %c0_29, %c0_30], %45 {strides = array<i32>} : memref<2x2x128xf32, #tpu.memory_space<vmem>>, vector<1x2x128xf32>,
    } else {
    }
    return
  }
  func.func @transform_0(%arg0: i32, %arg1: i32) -> (i32, i32, i32) {
    %c0_i32 = arith.constant 0 : i32
    %c0_i32_0 = arith.constant 0 : i32
    return %arg0, %c0_i32, %arg1 : i32, i32, i32
  }
  func.func @transform_1(%arg0: i32, %arg1: i32) -> (i32, i32) {
    %c0_i32 = arith.constant 0 : i32
    %c0_i32_0 = arith.constant 0 : i32
    %c0_i32_1 = arith.constant 0 : i32
    return %c0_i32, %c0_i32_0 : i32, i32
  }
  func.func @transform_2(%arg0: i32, %arg1: i32) -> (i32, i32) {
    %c0_i32 = arith.constant 0 : i32
    %c0_i32_0 = arith.constant 0 : i32
    %c0_i32_1 = arith.constant 0 : i32
    return %c0_i32, %c0_i32_0 : i32, i32
  }
  func.func @transform_3(%arg0: i32, %arg1: i32) -> (i32, i32) {
    %c0_i32 = arith.constant 0 : i32
    %c0_i32_0 = arith.constant 0 : i32
    %c0_i32_1 = arith.constant 0 : i32
    return %c0_i32, %c0_i32_0 : i32, i32
  }
  func.func @transform_4(%arg0: i32, %arg1: i32) -> (i32, i32) {
    %c0_i32 = arith.constant 0 : i32
    %c0_i32_0 = arith.constant 0 : i32
    %c0_i32_1 = arith.constant 0 : i32
    return %c0_i32, %c0_i32_0 : i32, i32
  }
  func.func @transform_5(%arg0: i32, %arg1: i32) -> (i32, i32) {
    %c0_i32 = arith.constant 0 : i32
    %c0_i32_0 = arith.constant 0 : i32
    %c0_i32_1 = arith.constant 0 : i32
    return %c0_i32, %c0_i32_0 : i32, i32
  }
  func.func @transform_6(%arg0: i32, %arg1: i32) -> (i32, i32, i32) {
    %c0_i32 = arith.constant 0 : i32
    %c0_i32_0 = arith.constant 0 : i32
    %c0_i32_1 = arith.constant 0 : i32
    return %c0_i32, %arg0, %c0_i32_0 : i32, i32, i32
  }
}

</mosaic_0001>

<llo_original>
// kernel: tpu_custom_call.1
$region0: #{tpu_custom_call.1}
  #allocation0 [shape = 'u32[]', space=smem, size = 0x4, offset = 0x4, fixed_abs, tag = 'smem constant byte address 0x4 - core index']
  #allocation1 [shape = 'u32[72,128]{1,0:T(1,128)}', space=vmem, size = 0x9000, scoped, tag = 'internal scratch']
  #allocation2 [shape = 'f32[2,256]{1,0:T(2,128)}', space=vmem, size = 0x800, scoped, tag = 'scratch operand']
  %s0 = inlined_call_operand.vmem [shape: bf16[2,4,256], index: 0, kind: input, shape index: {}]
  %s1 = inlined_call_operand.vmem [shape: bf16[256,4], index: 1, kind: input, shape index: {}]
  %s2 = inlined_call_operand.hbm [shape: bf16[128,512], index: 2, kind: input, shape index: {}]
  %s3 = inlined_call_operand.vmem [shape: f32[1,512], index: 3, kind: input, shape index: {}]
  %s4 = inlined_call_operand.hbm [shape: bf16[512,128], index: 4, kind: input, shape index: {}]
  %s5 = inlined_call_operand.vmem [shape: f32[1,128], index: 5, kind: input, shape index: {}]
  %s6 = inlined_call_operand.hbm [shape: f32[2,2,128], index: 6, kind: output, shape index: {}]
  %s7 = sld [smem:[#allocation0]]
  $region107: #{tpu_custom_call.1} parent=0
    _
  %s9 = ssub.s32 1, %s7
  %s10 = scalar_select 0, %s9, %s7
  $region1: #{tpu_custom_call.1} parent=0
    #allocation3 [shape = 'u8[4096]{0}', space=vmem, size = 0x1000, scoped, tag = 'input window, operand 0']
    #allocation4 [shape = 'u8[131072]{0}', space=vmem, size = 0x20000, scoped, tag = 'input window, operand 2, single buffered']
    #allocation5 [shape = 's32[2]{0}', space=sflag, size = 0x8, scoped, tag = 'scoped memory for tpu_custom_call.1']
    #allocation6 [shape = 's32[2]{0}', space=sflag, size = 0x8, scoped, tag = 'scoped memory for tpu_custom_call.1']
    #allocation7 [shape = 'u8[131072]{0}', space=vmem, size = 0x20000, scoped, tag = 'input window, operand 4, single buffered']
    #allocation8 [shape = 's32[1]{0}', space=sflag, size = 0x4, scoped, tag = 'scoped memory for tpu_custom_call.1']
    #allocation9 [shape = 'u8[2048]{0}', space=vmem, size = 0x800, scoped, tag = 'output window, operand 0, single buffered']
    %11 = vsyncpa [#allocation5], 0
    %12 = vsyncpa [#allocation8], 0
    %13 = vsyncpa [#allocation6], 0
    loop: start=0, step=1, limit=4
    $region2: #{tpu_custom_call.1} parent=1 // loop_pre_header
      _
    $region3: #{tpu_custom_call.1} parent=1 // loop_header
      %s15 = sphi 0, %s19
      %p16 = scmp.ge.s32.totalorder %s15, 4
      %s22 = sphi 0, %s34
      %s23 = sphi 0, %s30
      %s24 = sphi 0, %s22
      %s25 = sphi 0, %s23
      %s26 = sphi 0, %s24
      %s27 = sphi 0, %s25
      %s39 = sphi 0, %s41
      %s42 = sphi 0, %s39
      %s43 = sphi 0, %s42
      %s59 = sphi 0, %s43
      %s63 = sphi 0, %s63
      %s65 = sphi 0, %s63
      %s66 = sphi 0, %s65
      %s80 = sphi 0, %s66
      %s84 = sphi 0, %s84
      %s86 = sphi 0, %s84
      %s87 = sphi 0, %s86
      %s101 = sphi 0, %s87
      %s105 = sphi 0, %s105
      %s107 = sphi 0, %s105
      %s108 = sphi 0, %s107
      %s122 = sphi 0, %s108
      %s126 = sphi 0, %s126
      %s128 = sphi 0, %s126
      %s129 = sphi 0, %s128
      %s143 = sphi 0, %s129
      %s147 = sphi 0, %s147
      %s149 = sphi 0, %s147
      %s150 = sphi 0, %s149
      %s164 = sphi 0, %s150
      %s170 = sphi 0, %s172
      %s173 = sphi 0, %s170
      %s174 = sphi 0, %s173
      %s190 = sphi 0, %s174
    $region4: #{tpu_custom_call.1} parent=1 // loop_header_branch
      %18 = sbr.rel (%p16) target = $region8
    $region5: #{tpu_custom_call.1} parent=1 // loop_body
      %s20 = ssub.s32 %s15, 1
      %s21 = ssub.s32 %s15, 2
      %s28 = sadd.s32 1, %s23
      %p29 = scmp.ge.s32.totalorder %s28, 2
      %s30 = scalar_select %p29, 0, %s28
      %s31 = sadd.s32 1, %s22
      %s32 = scalar_select %p29, %s31, %s22
      %p33 = scmp.ge.s32.totalorder %s32, 1
      %s34 = scalar_select %p33, 0, %s32
      %s35 = ssub.s32 %s22, %s34
      %s36 = ssub.s32 %s23, %s30
      %s37 = sor.u32 %s35, %s36
      %p38 = scmp.eq.s32.totalorder %s37, 0
      %s40 = sadd.s32 %s39, 1
      %s41 = scalar_select %p38, %s39, %s40
      %p44 = pneg %p38
      %p45 = scmp.eq.s32.totalorder %s15, 1
      %p46 = por %p44, %p45
      %p47 = scmp.ne.s32.totalorder %s39, %s42
      %p48 = scmp.eq.s32.totalorder %s15, 0
      %p49 = por %p47, %p48
      %p50 = scmp.ne.s32.totalorder %s39, %s42
      %p51 = scmp.eq.s32.totalorder %s20, 1
      %p52 = por %p50, %p51
      %p53 = scmp.ne.s32.totalorder %s42, %s43
      %p54 = scmp.eq.s32.totalorder %s20, 0
      %p55 = por %p53, %p54
      %p56 = scmp.ne.s32.totalorder %s42, %s43
      %p57 = scmp.eq.s32.totalorder %s21, 1
      %p58 = por %p56, %p57
      %p60 = scmp.ne.s32.totalorder %s43, %s59
      %p61 = scmp.eq.s32.totalorder %s21, 0
      %p62 = por %p60, %p61
      %s64 = sadd.s32 %s63, 1
      %p67 = scmp.eq.s32.totalorder %s15, 1
      %p68 = scmp.ne.s32.totalorder %s63, %s65
      %p69 = scmp.eq.s32.totalorder %s15, 0
      %p70 = por %p68, %p69
      %p71 = scmp.ne.s32.totalorder %s63, %s65
      %p72 = scmp.eq.s32.totalorder %s20, 1
      %p73 = por %p71, %p72
      %p74 = scmp.ne.s32.totalorder %s65, %s66
      %p75 = scmp.eq.s32.totalorder %s20, 0
      %p76 = por %p74, %p75
      %p77 = scmp.ne.s32.totalorder %s65, %s66
      %p78 = scmp.eq.s32.totalorder %s21, 1
      %p79 = por %p77, %p78
      %p81 = scmp.ne.s32.totalorder %s66, %s80
      %p82 = scmp.eq.s32.totalorder %s21, 0
      %p83 = por %p81, %p82
      %s85 = sadd.s32 %s84, 1
      %p88 = scmp.eq.s32.totalorder %s15, 1
      %p89 = scmp.ne.s32.totalorder %s84, %s86
      %p90 = scmp.eq.s32.totalorder %s15, 0
      %p91 = por %p89, %p90
      %p92 = scmp.ne.s32.totalorder %s84, %s86
      %p93 = scmp.eq.s32.totalorder %s20, 1
      %p94 = por %p92, %p93
      %p95 = scmp.ne.s32.totalorder %s86, %s87
      %p96 = scmp.eq.s32.totalorder %s20, 0
      %p97 = por %p95, %p96
      %p98 = scmp.ne.s32.totalorder %s86, %s87
      %p99 = scmp.eq.s32.totalorder %s21, 1
      %p100 = por %p98, %p99
      %p102 = scmp.ne.s32.totalorder %s87, %s101
      %p103 = scmp.eq.s32.totalorder %s21, 0
      %p104 = por %p102, %p103
      %s106 = sadd.s32 %s105, 1
      %p109 = scmp.eq.s32.totalorder %s15, 1
      %p110 = scmp.ne.s32.totalorder %s105, %s107
      %p111 = scmp.eq.s32.totalorder %s15, 0
      %p112 = por %p110, %p111
      %p113 = scmp.ne.s32.totalorder %s105, %s107
      %p114 = scmp.eq.s32.totalorder %s20, 1
      %p115 = por %p113, %p114
      %p116 = scmp.ne.s32.totalorder %s107, %s108
      %p117 = scmp.eq.s32.totalorder %s20, 0
      %p118 = por %p116, %p117
      %p119 = scmp.ne.s32.totalorder %s107, %s108
      %p120 = scmp.eq.s32.totalorder %s21, 1
      %p121 = por %p119, %p120
      %p123 = scmp.ne.s32.totalorder %s108, %s122
      %p124 = scmp.eq.s32.totalorder %s21, 0
      %p125 = por %p123, %p124
      %s127 = sadd.s32 %s126, 1
      %p130 = scmp.eq.s32.totalorder %s15, 1
      %p131 = scmp.ne.s32.totalorder %s126, %s128
      %p132 = scmp.eq.s32.totalorder %s15, 0
      %p133 = por %p131, %p132
      %p134 = scmp.ne.s32.totalorder %s126, %s128
      %p135 = scmp.eq.s32.totalorder %s20, 1
      %p136 = por %p134, %p135
      %p137 = scmp.ne.s32.totalorder %s128, %s129
      %p138 = scmp.eq.s32.totalorder %s20, 0
      %p139 = por %p137, %p138
      %p140 = scmp.ne.s32.totalorder %s128, %s129
      %p141 = scmp.eq.s32.totalorder %s21, 1
      %p142 = por %p140, %p141
      %p144 = scmp.ne.s32.totalorder %s129, %s143
      %p145 = scmp.eq.s32.totalorder %s21, 0
      %p146 = por %p144, %p145
      %s148 = sadd.s32 %s147, 1
      %p151 = scmp.eq.s32.totalorder %s15, 1
      %p152 = scmp.ne.s32.totalorder %s147, %s149
      %p153 = scmp.eq.s32.totalorder %s15, 0
      %p154 = por %p152, %p153
      %p155 = scmp.ne.s32.totalorder %s147, %s149
      %p156 = scmp.eq.s32.totalorder %s20, 1
      %p157 = por %p155, %p156
      %p158 = scmp.ne.s32.totalorder %s149, %s150
      %p159 = scmp.eq.s32.totalorder %s20, 0
      %p160 = por %p158, %p159
      %p161 = scmp.ne.s32.totalorder %s149, %s150
      %p162 = scmp.eq.s32.totalorder %s21, 1
      %p163 = por %p161, %p162
      %p165 = scmp.ne.s32.totalorder %s150, %s164
      %p166 = scmp.eq.s32.totalorder %s21, 0
      %p167 = por %p165, %p166
      %s168 = ssub.s32 %s22, %s34
      %p169 = scmp.eq.s32.totalorder %s168, 0
      %s171 = sadd.s32 %s170, 1
      %s172 = scalar_select %p169, %s170, %s171
      %p175 = pneg %p169
      %p176 = scmp.eq.s32.totalorder %s15, 1
      %p177 = por %p175, %p176
      %p178 = scmp.ne.s32.totalorder %s170, %s173
      %p179 = scmp.eq.s32.totalorder %s15, 0
      %p180 = por %p178, %p179
      %p181 = scmp.ne.s32.totalorder %s170, %s173
      %p182 = scmp.eq.s32.totalorder %s20, 1
      %p183 = por %p181, %p182
      %p184 = scmp.ne.s32.totalorder %s173, %s174
      %p185 = scmp.eq.s32.totalorder %s20, 0
      %p186 = por %p184, %p185
      %p187 = scmp.ne.s32.totalorder %s173, %s174
      %p188 = scmp.eq.s32.totalorder %s21, 1
      %p189 = por %p187, %p188
      %p191 = scmp.ne.s32.totalorder %s174, %s190
      %p192 = scmp.eq.s32.totalorder %s21, 0
      %p193 = por %p191, %p192
      %p194 = scmp.le.s32.totalorder 1, %s15
      %p195 = scmp.lt.s32.totalorder %s15, 3
      %p196 = pnand %p194, %p195
      %p197 = pneg %p196
      // Predicated region
      $region9: #{tpu_custom_call.1} parent=5 // pred_check
        _
      $region10: #{tpu_custom_call.1} parent=5 // pred_check_branch
        %199 = sbr.rel (%p196) target = $region12
      $region11: #{tpu_custom_call.1} parent=5 // pred_region
        %s200 = ssub.s32 %s15, 1
        // Predicated region
        $region13: #{tpu_custom_call.1} parent=11 // pred_check
          %p201 = pneg %p76
        $region14: #{tpu_custom_call.1} parent=11 // pred_check_branch
          %203 = sbr.rel (%p201) target = $region16
        $region15: #{tpu_custom_call.1} parent=11 // pred_region
          _
        $region16: #{tpu_custom_call.1} parent=11 // pred_fallthru
          _
        // Predicated region
        $region17: #{tpu_custom_call.1} parent=11 // pred_check
          %p204 = pneg %p97
        $region18: #{tpu_custom_call.1} parent=11 // pred_check_branch
          %206 = sbr.rel (%p204) target = $region20
        $region19: #{tpu_custom_call.1} parent=11 // pred_region
          %208 = vsyncadd [#allocation5], 0
          %s209 = sshll.u32 %s2, 4
          %s210 = int_to_ptr.hbm [resolvable:$true] %s209
          %s211 = sshll.u32 [#allocation4], 4
          %s212 = int_to_ptr.vmem [resolvable:$true] %s211
          %217 = dma.hbm_to_vmem [thread:$0]  %s210, 4096, %s212, [#allocation5], 256, 256, 16
        $region20: #{tpu_custom_call.1} parent=11 // pred_fallthru
          _
        // Predicated region
        $region21: #{tpu_custom_call.1} parent=11 // pred_check
          %p218 = pneg %p118
        $region22: #{tpu_custom_call.1} parent=11 // pred_check_branch
          %220 = sbr.rel (%p218) target = $region24
        $region23: #{tpu_custom_call.1} parent=11 // pred_region
          _
        $region24: #{tpu_custom_call.1} parent=11 // pred_fallthru
          _
        // Predicated region
        $region25: #{tpu_custom_call.1} parent=11 // pred_check
          %p221 = pneg %p139
        $region26: #{tpu_custom_call.1} parent=11 // pred_check_branch
          %223 = sbr.rel (%p221) target = $region28
        $region27: #{tpu_custom_call.1} parent=11 // pred_region
          %225 = vsyncadd [#allocation8], 0
          %s226 = sshll.u32 %s4, 4
          %s227 = int_to_ptr.hbm [resolvable:$true] %s226
          %s228 = sshll.u32 [#allocation7], 4
          %s229 = int_to_ptr.vmem [resolvable:$true] %s228
          %234 = dma.hbm_to_vmem [thread:$0]  %s227, 4096, %s229, [#allocation8], 64, 64, 4
        $region28: #{tpu_custom_call.1} parent=11 // pred_fallthru
          _
        // Predicated region
        $region29: #{tpu_custom_call.1} parent=11 // pred_check
          %p235 = pneg %p160
        $region30: #{tpu_custom_call.1} parent=11 // pred_check_branch
          %237 = sbr.rel (%p235) target = $region32
        $region31: #{tpu_custom_call.1} parent=11 // pred_region
          _
        $region32: #{tpu_custom_call.1} parent=11 // pred_fallthru
          _
      $region12: #{tpu_custom_call.1} parent=5 // pred_fallthru
        _
      %p238 = scmp.lt.s32.totalorder %s15, 2
      // Predicated region
      $region33: #{tpu_custom_call.1} parent=5 // pred_check
        %p239 = pneg %p238
      $region34: #{tpu_custom_call.1} parent=5 // pred_check_branch
        %241 = sbr.rel (%p239) target = $region36
      $region35: #{tpu_custom_call.1} parent=5 // pred_region
        // Predicated region
        $region37: #{tpu_custom_call.1} parent=35 // pred_check
          %p242 = pneg %p49
        $region38: #{tpu_custom_call.1} parent=35 // pred_check_branch
          %244 = sbr.rel (%p242) target = $region40
        $region39: #{tpu_custom_call.1} parent=35 // pred_region
          %s245 = sand.u32 %s39, 1
          %s246 = sand.u32 %s39, 1
          %s247 = smul.addr %s246, 4
          %s248 = scalar_lea.vmem [#allocation3], %s247
          %s249 = smul.u32 2, %s22
          %s250 = smul.addr %s249, 2
          %s251 = sadd.s32 %s23, %s250
          %s252 = smul.addr %s251, 2
          %s253 = scalar_lea.vmem %s0, %s252
          // Predicated region
          $region41: #{tpu_custom_call.1} parent=39 // pred_check
            _
          $region42: #{tpu_custom_call.1} parent=39 // pred_check_branch
            %255 = sbr.rel (0) target = $region44
          $region43: #{tpu_custom_call.1} parent=39 // pred_region
            // Predicated region
            $region45: #{tpu_custom_call.1} parent=43 // pred_check
              _
            $region46: #{tpu_custom_call.1} parent=43 // pred_check_branch
              %257 = sbr.rel target = $region48
            $region47: #{tpu_custom_call.1} parent=43 // pred_region
              // Predicated region
              $region60: #{tpu_custom_call.1} parent=47 // pred_check
                _
              $region61: #{tpu_custom_call.1} parent=47 // pred_check_branch
                %275 = sbr.rel (0) target = $region63
              $region62: #{tpu_custom_call.1} parent=47 // pred_region
                %s277 = ssub.s32 4, 1
                loop: start=0, step=1, limit=1
                $region64: #{tpu_custom_call.1} parent=62 // loop_pre_header
                  _
                $region65: #{tpu_custom_call.1} parent=62 // loop_header
                  %s279 = sphi 0, %s283
                  %p280 = scmp.ge.s32.totalorder %s279, 1
                  %s284 = sphi %s253, %s253
                  %s285 = sphi %s248, %s248
                $region66: #{tpu_custom_call.1} parent=62 // loop_header_branch
                  %282 = sbr.rel (%p280) target = $region70
                $region67: #{tpu_custom_call.1} parent=62 // loop_body
                  %v286 = vld [vmem:[%s284] sm:%s277]
                  %287 = vst [vmem:[%s285] sm:%s277] %v286
                  %v288 = vld [vmem:[%s284 + $0x4] sm:%s277]
                  %289 = vst [vmem:[%s285 + $0x2] sm:%s277] %v288
                $region68: #{tpu_custom_call.1} parent=62 // loop_footer
                  %s283 = sadd.s32 1, %s279
                $region69: #{tpu_custom_call.1} parent=62 // loop_footer_branch
                  %278 = sbr.rel target = $region65
                $region70: #{tpu_custom_call.1} parent=62 // loop_exit
                  _
              $region63: #{tpu_custom_call.1} parent=47 // pred_fallthru
                _
            $region48: #{tpu_custom_call.1} parent=43 // pred_fallthru
              _
            // Predicated region
            $region49: #{tpu_custom_call.1} parent=43 // pred_check
              _
            $region50: #{tpu_custom_call.1} parent=43 // pred_check_branch
              %259 = sbr.rel (0) target = $region52
            $region51: #{tpu_custom_call.1} parent=43 // pred_region
              %s261 = ssub.s32 4, 1
              loop: start=0, step=1, limit=1
              $region53: #{tpu_custom_call.1} parent=51 // loop_pre_header
                _
              $region54: #{tpu_custom_call.1} parent=51 // loop_header
                %s263 = sphi 0, %s267
                %p264 = scmp.ge.s32.totalorder %s263, 1
                %s268 = sphi %s253, %s253
                %s269 = sphi %s248, %s248
              $region55: #{tpu_custom_call.1} parent=51 // loop_header_branch
                %266 = sbr.rel (%p264) target = $region59
              $region56: #{tpu_custom_call.1} parent=51 // loop_body
                %v270 = vld [vmem:[%s268] sm:%s261]
                %271 = vst [vmem:[%s269] sm:%s261] %v270
                %v272 = vld [vmem:[%s268 + $0x4] sm:%s261]
                %273 = vst [vmem:[%s269 + $0x2] sm:%s261] %v272
              $region57: #{tpu_custom_call.1} parent=51 // loop_footer
                %s267 = sadd.s32 1, %s263
              $region58: #{tpu_custom_call.1} parent=51 // loop_footer_branch
                %262 = sbr.rel target = $region54
              $region59: #{tpu_custom_call.1} parent=51 // loop_exit
                _
            $region52: #{tpu_custom_call.1} parent=43 // pred_fallthru
              _
          $region44: #{tpu_custom_call.1} parent=39 // pred_fallthru
            _
          %290 = vnop
        $region40: #{tpu_custom_call.1} parent=35 // pred_fallthru
          _
      $region36: #{tpu_custom_call.1} parent=5 // pred_fallthru
        _
      %p291 = scmp.le.s32.totalorder 1, %s15
      %p292 = scmp.lt.s32.totalorder %s15, 3
      %p293 = pnand %p291, %p292
      %p294 = pneg %p293
      // Predicated region
      $region71: #{tpu_custom_call.1} parent=5 // pred_check
        _
      $region72: #{tpu_custom_call.1} parent=5 // pred_check_branch
        %296 = sbr.rel (%p293) target = $region74
      $region73: #{tpu_custom_call.1} parent=5 // pred_region
        %s297 = ssub.s32 %s15, 1
        %s298 = sand.u32 %s42, 1
        %s299 = sand.u32 %s42, 1
        %s300 = smul.addr %s299, 4
        %s301 = scalar_lea.vmem [#allocation3], %s300
        // Predicated region
        $region75: #{tpu_custom_call.1} parent=73 // pred_check
          %p302 = pneg %p55
        $region76: #{tpu_custom_call.1} parent=73 // pred_check_branch
          %304 = sbr.rel (%p302) target = $region78
        $region77: #{tpu_custom_call.1} parent=73 // pred_region
          _
        $region78: #{tpu_custom_call.1} parent=73 // pred_fallthru
          _
        // Predicated region
        $region79: #{tpu_custom_call.1} parent=73 // pred_check
          %p305 = pneg %p97
        $region80: #{tpu_custom_call.1} parent=73 // pred_check_branch
          %307 = sbr.rel (%p305) target = $region82
        $region81: #{tpu_custom_call.1} parent=73 // pred_region
          %309 = dma.done [#allocation5], 4096
        $region82: #{tpu_custom_call.1} parent=73 // pred_fallthru
          _
        // Predicated region
        $region83: #{tpu_custom_call.1} parent=73 // pred_check
          %p310 = pneg %p139
        $region84: #{tpu_custom_call.1} parent=73 // pred_check_branch
          %312 = sbr.rel (%p310) target = $region86
        $region85: #{tpu_custom_call.1} parent=73 // pred_region
          %314 = dma.done [#allocation8], 4096
        $region86: #{tpu_custom_call.1} parent=73 // pred_fallthru
          _
        %s315 = sand.u32 %s42, 1
        %s316 = sand.u32 %s42, 1
        %s317 = smul.addr %s316, 4
        %s318 = scalar_lea.vmem [#allocation3], %s317
        %p319 = pneg %p55
        %p320 = pneg %p52
        %p321 = pneg %p76
        %p322 = pneg %p73
        %p323 = pneg %p97
        %p324 = pneg %p94
        %p325 = pneg %p118
        %p326 = pneg %p115
        %p327 = pneg %p139
        %p328 = pneg %p136
        %p329 = pneg %p160
        %p330 = pneg %p157
        %p331 = pneg %p186
        %p332 = pneg %p183
        %s333 = smul.u32 2, %s24
        %p335 = scmp.eq.s32.totalorder %s25, 0
        // Predicated region
        $region87: #{tpu_custom_call.1} parent=73 // pred_check
          %p336 = pneg %p335
        $region88: #{tpu_custom_call.1} parent=73 // pred_check_branch
          %338 = sbr.rel (%p336) target = $region90
        $region89: #{tpu_custom_call.1} parent=73 // pred_region
          %339 = vst [vmem:[#allocation2] sm:$0xf] 0.0
        $region90: #{tpu_custom_call.1} parent=73 // pred_fallthru
          _
        %v340 = vld [vmem:[%s301] sm:$0x3]
        %v341 = vld [vmem:[%s301 + $0x2] sm:$0x3]
        %v342 = vld [vmem:[%s1] sm:$0xf]
        %v343 = vld [vmem:[%s1 + $0x4] sm:$0xf]
        %v344 = vld [vmem:[%s1 + $0x8] sm:$0xf]
        %v345 = vld [vmem:[%s1 + $0xc] sm:$0xf]
        %v346 = vld [vmem:[%s1 + $0x10] sm:$0xf]
        %v347 = vld [vmem:[%s1 + $0x14] sm:$0xf]
        %v348 = vld [vmem:[%s1 + $0x18] sm:$0xf]
        %v349 = vld [vmem:[%s1 + $0x1c] sm:$0xf]
        %v350 = vld [vmem:[%s1 + $0x20] sm:$0xf]
        %v351 = vld [vmem:[%s1 + $0x24] sm:$0xf]
        %v352 = vld [vmem:[%s1 + $0x28] sm:$0xf]
        %v353 = vld [vmem:[%s1 + $0x2c] sm:$0xf]
        %v354 = vld [vmem:[%s1 + $0x30] sm:$0xf]
        %v355 = vld [vmem:[%s1 + $0x34] sm:$0xf]
        %v356 = vld [vmem:[%s1 + $0x38] sm:$0xf]
        %v357 = vld [vmem:[%s1 + $0x3c] sm:$0xf]
        %v358 = vld [vmem:[%s1 + $0x40] sm:$0xf]
        %v359 = vld [vmem:[%s1 + $0x44] sm:$0xf]
        %v360 = vld [vmem:[%s1 + $0x48] sm:$0xf]
        %v361 = vld [vmem:[%s1 + $0x4c] sm:$0xf]
        %v362 = vld [vmem:[%s1 + $0x50] sm:$0xf]
        %v363 = vld [vmem:[%s1 + $0x54] sm:$0xf]
        %v364 = vld [vmem:[%s1 + $0x58] sm:$0xf]
        %v365 = vld [vmem:[%s1 + $0x5c] sm:$0xf]
        %v366 = vld [vmem:[%s1 + $0x60] sm:$0xf]
        %v367 = vld [vmem:[%s1 + $0x64] sm:$0xf]
        %v368 = vld [vmem:[%s1 + $0x68] sm:$0xf]
        %v369 = vld [vmem:[%s1 + $0x6c] sm:$0xf]
        %v370 = vld [vmem:[%s1 + $0x70] sm:$0xf]
        %v371 = vld [vmem:[%s1 + $0x74] sm:$0xf]
        %v372 = vld [vmem:[%s1 + $0x78] sm:$0xf]
        %v373 = vld [vmem:[%s1 + $0x7c] sm:$0xf]
        %v406 = vunpack.c.l.b16 %v342
        %v407 = vunpack.c.l.b16 %v343
        %v408 = vunpack.c.l.b16 %v344
        %v409 = vunpack.c.l.b16 %v345
        %v410 = vunpack.c.l.b16 %v346
        %v411 = vunpack.c.l.b16 %v347
        %v412 = vunpack.c.l.b16 %v348
        %v413 = vunpack.c.l.b16 %v349
        %v414 = vunpack.c.l.b16 %v350
        %v415 = vunpack.c.l.b16 %v351
        %v416 = vunpack.c.l.b16 %v352
        %v417 = vunpack.c.l.b16 %v353
        %v418 = vunpack.c.l.b16 %v354
        %v419 = vunpack.c.l.b16 %v355
        %v420 = vunpack.c.l.b16 %v356
        %v421 = vunpack.c.l.b16 %v357
        %v422 = vunpack.c.l.b16 %v358
        %v423 = vunpack.c.l.b16 %v359
        %v424 = vunpack.c.l.b16 %v360
        %v425 = vunpack.c.l.b16 %v361
        %v426 = vunpack.c.l.b16 %v362
        %v427 = vunpack.c.l.b16 %v363
        %v428 = vunpack.c.l.b16 %v364
        %v429 = vunpack.c.l.b16 %v365
        %v430 = vunpack.c.l.b16 %v366
        %v431 = vunpack.c.l.b16 %v367
        %v432 = vunpack.c.l.b16 %v368
        %v433 = vunpack.c.l.b16 %v369
        %v434 = vunpack.c.l.b16 %v370
        %v435 = vunpack.c.l.b16 %v371
        %v436 = vunpack.c.l.b16 %v372
        %v437 = vunpack.c.l.b16 %v373
        %v438 = vpack.c.b16 %v407, %v406
        %v439 = vpack.c.b16 %v409, %v408
        %v440 = vpack.c.b16 %v411, %v410
        %v441 = vpack.c.b16 %v413, %v412
        %v442 = vpack.c.b16 %v415, %v414
        %v443 = vpack.c.b16 %v417, %v416
        %v444 = vpack.c.b16 %v419, %v418
        %v445 = vpack.c.b16 %v421, %v420
        %v446 = vpack.c.b16 %v423, %v422
        %v447 = vpack.c.b16 %v425, %v424
        %v448 = vpack.c.b16 %v427, %v426
        %v449 = vpack.c.b16 %v429, %v428
        %v450 = vpack.c.b16 %v431, %v430
        %v451 = vpack.c.b16 %v433, %v432
        %v452 = vpack.c.b16 %v435, %v434
        %v453 = vpack.c.b16 %v437, %v436
        %vm454 = vcmask 31744
        %v456 = vsel %vm454, %v438, 0
        %v459 = vsel %vm454, %v439, 0
        %v462 = vsel %vm454, %v440, 0
        %v465 = vsel %vm454, %v441, 0
        %v468 = vsel %vm454, %v442, 0
        %v471 = vsel %vm454, %v443, 0
        %v474 = vsel %vm454, %v444, 0
        %v477 = vsel %vm454, %v445, 0
        %v480 = vsel %vm454, %v446, 0
        %v483 = vsel %vm454, %v447, 0
        %v486 = vsel %vm454, %v448, 0
        %v489 = vsel %vm454, %v449, 0
        %v492 = vsel %vm454, %v450, 0
        %v495 = vsel %vm454, %v451, 0
        %v498 = vsel %vm454, %v452, 0
        %v501 = vsel %vm454, %v453, 0
        %vm503 = vcmask 1041408
        %v505 = vsel %vm503, %v340, 0
        %507 = vmatpush.bf16.msra.mxu0 0
        %508 = vmatpush.bf16.msra.mxu0 0
        %509 = vmatpush.bf16.msra.mxu0 0
        %510 = vmatpush.bf16.msra.mxu0 0
        %511 = vmatpush.bf16.msra.mxu0 0
        %512 = vmatpush.bf16.msra.mxu0 0
        %513 = vmatpush.bf16.msra.mxu0 0
        %514 = vmatpush.bf16.msra.mxu0 %v505
        %515 = vmatmul.bf16.gmra.mxu0 %v456
        %v516 = vpop.f32.mrf.mxu0
        %v517 = vadd.f32 0.0, %v516
        %v518 = vpop.f32.mrf.mxu0
        %v519 = vadd.f32 0.0, %v518
        %520 = vmatmul.bf16.gmra.mxu0 %v459
        %v521 = vpop.f32.mrf.mxu0
        %v522 = vadd.f32 0.0, %v521
        %v523 = vpop.f32.mrf.mxu0
        %v524 = vadd.f32 0.0, %v523
        %525 = vmatmul.bf16.gmra.mxu0 %v462
        %v526 = vpop.f32.mrf.mxu0
        %v527 = vadd.f32 0.0, %v526
        %v528 = vpop.f32.mrf.mxu0
        %v529 = vadd.f32 0.0, %v528
        %530 = vmatmul.bf16.gmra.mxu0 %v465
        %v531 = vpop.f32.mrf.mxu0
        %v532 = vadd.f32 0.0, %v531
        %v533 = vpop.f32.mrf.mxu0
        %v534 = vadd.f32 0.0, %v533
        %535 = vmatmul.bf16.gmra.mxu0 %v468
        %v536 = vpop.f32.mrf.mxu0
        %v537 = vadd.f32 0.0, %v536
        %v538 = vpop.f32.mrf.mxu0
        %v539 = vadd.f32 0.0, %v538
        %540 = vmatmul.bf16.gmra.mxu0 %v471
        %v541 = vpop.f32.mrf.mxu0
        %v542 = vadd.f32 0.0, %v541
        %v543 = vpop.f32.mrf.mxu0
        %v544 = vadd.f32 0.0, %v543
        %545 = vmatmul.bf16.gmra.mxu0 %v474
        %v546 = vpop.f32.mrf.mxu0
        %v547 = vadd.f32 0.0, %v546
        %v548 = vpop.f32.mrf.mxu0
        %v549 = vadd.f32 0.0, %v548
        %550 = vmatmul.bf16.gmra.mxu0 %v477
        %v551 = vpop.f32.mrf.mxu0
        %v552 = vadd.f32 0.0, %v551
        %v553 = vpop.f32.mrf.mxu0
        %v554 = vadd.f32 0.0, %v553
        %555 = vmatmul.bf16.gmra.mxu0 %v480
        %v556 = vpop.f32.mrf.mxu0
        %v557 = vadd.f32 0.0, %v556
        %v558 = vpop.f32.mrf.mxu0
        %v559 = vadd.f32 0.0, %v558
        %560 = vmatmul.bf16.gmra.mxu0 %v483
        %v561 = vpop.f32.mrf.mxu0
        %v562 = vadd.f32 0.0, %v561
        %v563 = vpop.f32.mrf.mxu0
        %v564 = vadd.f32 0.0, %v563
        %565 = vmatmul.bf16.gmra.mxu0 %v486
        %v566 = vpop.f32.mrf.mxu0
        %v567 = vadd.f32 0.0, %v566
        %v568 = vpop.f32.mrf.mxu0
        %v569 = vadd.f32 0.0, %v568
        %570 = vmatmul.bf16.gmra.mxu0 %v489
        %v571 = vpop.f32.mrf.mxu0
        %v572 = vadd.f32 0.0, %v571
        %v573 = vpop.f32.mrf.mxu0
        %v574 = vadd.f32 0.0, %v573
        %575 = vmatmul.bf16.gmra.mxu0 %v492
        %v576 = vpop.f32.mrf.mxu0
        %v577 = vadd.f32 0.0, %v576
        %v578 = vpop.f32.mrf.mxu0
        %v579 = vadd.f32 0.0, %v578
        %580 = vmatmul.bf16.gmra.mxu0 %v495
        %v581 = vpop.f32.mrf.mxu0
        %v582 = vadd.f32 0.0, %v581
        %v583 = vpop.f32.mrf.mxu0
        %v584 = vadd.f32 0.0, %v583
        %585 = vmatmul.bf16.gmra.mxu0 %v498
        %v586 = vpop.f32.mrf.mxu0
        %v587 = vadd.f32 0.0, %v586
        %v588 = vpop.f32.mrf.mxu0
        %v589 = vadd.f32 0.0, %v588
        %590 = vmatmul.bf16.gmra.mxu0 %v501
        %v591 = vpop.f32.mrf.mxu0
        %v592 = vadd.f32 0.0, %v591
        %v593 = vpop.f32.mrf.mxu0
        %v594 = vadd.f32 0.0, %v593
        %595 = vdwg.mxu0
        %v597 = vsel %vm503, %v341, 0
        %599 = vmatpush.bf16.msra.mxu0 0
        %600 = vmatpush.bf16.msra.mxu0 0
        %601 = vmatpush.bf16.msra.mxu0 0
        %602 = vmatpush.bf16.msra.mxu0 0
        %603 = vmatpush.bf16.msra.mxu0 0
        %604 = vmatpush.bf16.msra.mxu0 0
        %605 = vmatpush.bf16.msra.mxu0 0
        %606 = vmatpush.bf16.msra.mxu0 %v597
        %607 = vmatmul.bf16.gmra.mxu0 %v456
        %v608 = vpop.f32.mrf.mxu0
        %v609 = vadd.f32 0.0, %v608
        %v610 = vpop.f32.mrf.mxu0
        %v611 = vadd.f32 0.0, %v610
        %612 = vmatmul.bf16.gmra.mxu0 %v459
        %v613 = vpop.f32.mrf.mxu0
        %v614 = vadd.f32 0.0, %v613
        %v615 = vpop.f32.mrf.mxu0
        %v616 = vadd.f32 0.0, %v615
        %617 = vmatmul.bf16.gmra.mxu0 %v462
        %v618 = vpop.f32.mrf.mxu0
        %v619 = vadd.f32 0.0, %v618
        %v620 = vpop.f32.mrf.mxu0
        %v621 = vadd.f32 0.0, %v620
        %622 = vmatmul.bf16.gmra.mxu0 %v465
        %v623 = vpop.f32.mrf.mxu0
        %v624 = vadd.f32 0.0, %v623
        %v625 = vpop.f32.mrf.mxu0
        %v626 = vadd.f32 0.0, %v625
        %627 = vmatmul.bf16.gmra.mxu0 %v468
        %v628 = vpop.f32.mrf.mxu0
        %v629 = vadd.f32 0.0, %v628
        %v630 = vpop.f32.mrf.mxu0
        %v631 = vadd.f32 0.0, %v630
        %632 = vmatmul.bf16.gmra.mxu0 %v471
        %v633 = vpop.f32.mrf.mxu0
        %v634 = vadd.f32 0.0, %v633
        %v635 = vpop.f32.mrf.mxu0
        %v636 = vadd.f32 0.0, %v635
        %637 = vmatmul.bf16.gmra.mxu0 %v474
        %v638 = vpop.f32.mrf.mxu0
        %v639 = vadd.f32 0.0, %v638
        %v640 = vpop.f32.mrf.mxu0
        %v641 = vadd.f32 0.0, %v640
        %642 = vmatmul.bf16.gmra.mxu0 %v477
        %v643 = vpop.f32.mrf.mxu0
        %v644 = vadd.f32 0.0, %v643
        %v645 = vpop.f32.mrf.mxu0
        %v646 = vadd.f32 0.0, %v645
        %647 = vmatmul.bf16.gmra.mxu0 %v480
        %v648 = vpop.f32.mrf.mxu0
        %v649 = vadd.f32 0.0, %v648
        %v650 = vpop.f32.mrf.mxu0
        %v651 = vadd.f32 0.0, %v650
        %652 = vmatmul.bf16.gmra.mxu0 %v483
        %v653 = vpop.f32.mrf.mxu0
        %v654 = vadd.f32 0.0, %v653
        %v655 = vpop.f32.mrf.mxu0
        %v656 = vadd.f32 0.0, %v655
        %657 = vmatmul.bf16.gmra.mxu0 %v486
        %v658 = vpop.f32.mrf.mxu0
        %v659 = vadd.f32 0.0, %v658
        %v660 = vpop.f32.mrf.mxu0
        %v661 = vadd.f32 0.0, %v660
        %662 = vmatmul.bf16.gmra.mxu0 %v489
        %v663 = vpop.f32.mrf.mxu0
        %v664 = vadd.f32 0.0, %v663
        %v665 = vpop.f32.mrf.mxu0
        %v666 = vadd.f32 0.0, %v665
        %667 = vmatmul.bf16.gmra.mxu0 %v492
        %v668 = vpop.f32.mrf.mxu0
        %v669 = vadd.f32 0.0, %v668
        %v670 = vpop.f32.mrf.mxu0
        %v671 = vadd.f32 0.0, %v670
        %672 = vmatmul.bf16.gmra.mxu0 %v495
        %v673 = vpop.f32.mrf.mxu0
        %v674 = vadd.f32 0.0, %v673
        %v675 = vpop.f32.mrf.mxu0
        %v676 = vadd.f32 0.0, %v675
        %677 = vmatmul.bf16.gmra.mxu0 %v498
        %v678 = vpop.f32.mrf.mxu0
        %v679 = vadd.f32 0.0, %v678
        %v680 = vpop.f32.mrf.mxu0
        %v681 = vadd.f32 0.0, %v680
        %682 = vmatmul.bf16.gmra.mxu0 %v501
        %v683 = vpop.f32.mrf.mxu0
        %v684 = vadd.f32 0.0, %v683
        %v685 = vpop.f32.mrf.mxu0
        %v686 = vadd.f32 0.0, %v685
        %687 = vdwg.mxu0
        %v688 = vmax.f32 %v517, 0.0
        %v689 = vmax.f32 %v519, 0.0
        %v690 = vmax.f32 %v522, 0.0
        %v691 = vmax.f32 %v524, 0.0
        %v692 = vmax.f32 %v527, 0.0
        %v693 = vmax.f32 %v529, 0.0
        %v694 = vmax.f32 %v532, 0.0
        %v695 = vmax.f32 %v534, 0.0
        %v696 = vmax.f32 %v537, 0.0
        %v697 = vmax.f32 %v539, 0.0
        %v698 = vmax.f32 %v542, 0.0
        %v699 = vmax.f32 %v544, 0.0
        %v700 = vmax.f32 %v547, 0.0
        %v701 = vmax.f32 %v549, 0.0
        %v702 = vmax.f32 %v552, 0.0
        %v703 = vmax.f32 %v554, 0.0
        %v704 = vmax.f32 %v557, 0.0
        %v705 = vmax.f32 %v559, 0.0
        %v706 = vmax.f32 %v562, 0.0
        %v707 = vmax.f32 %v564, 0.0
        %v708 = vmax.f32 %v567, 0.0
        %v709 = vmax.f32 %v569, 0.0
        %v710 = vmax.f32 %v572, 0.0
        %v711 = vmax.f32 %v574, 0.0
        %v712 = vmax.f32 %v577, 0.0
        %v713 = vmax.f32 %v579, 0.0
        %v714 = vmax.f32 %v582, 0.0
        %v715 = vmax.f32 %v584, 0.0
        %v716 = vmax.f32 %v587, 0.0
        %v717 = vmax.f32 %v589, 0.0
        %v718 = vmax.f32 %v592, 0.0
        %v719 = vmax.f32 %v594, 0.0
        %v720 = vmax.f32 %v609, 0.0
        %v721 = vmax.f32 %v611, 0.0
        %v722 = vmax.f32 %v614, 0.0
        %v723 = vmax.f32 %v616, 0.0
        %v724 = vmax.f32 %v619, 0.0
        %v725 = vmax.f32 %v621, 0.0
        %v726 = vmax.f32 %v624, 0.0
        %v727 = vmax.f32 %v626, 0.0
        %v728 = vmax.f32 %v629, 0.0
        %v729 = vmax.f32 %v631, 0.0
        %v730 = vmax.f32 %v634, 0.0
        %v731 = vmax.f32 %v636, 0.0
        %v732 = vmax.f32 %v639, 0.0
        %v733 = vmax.f32 %v641, 0.0
        %v734 = vmax.f32 %v644, 0.0
        %v735 = vmax.f32 %v646, 0.0
        %v736 = vmax.f32 %v649, 0.0
        %v737 = vmax.f32 %v651, 0.0
        %v738 = vmax.f32 %v654, 0.0
        %v739 = vmax.f32 %v656, 0.0
        %v740 = vmax.f32 %v659, 0.0
        %v741 = vmax.f32 %v661, 0.0
        %v742 = vmax.f32 %v664, 0.0
        %v743 = vmax.f32 %v666, 0.0
        %v744 = vmax.f32 %v669, 0.0
        %v745 = vmax.f32 %v671, 0.0
        %v746 = vmax.f32 %v674, 0.0
        %v747 = vmax.f32 %v676, 0.0
        %v748 = vmax.f32 %v679, 0.0
        %v749 = vmax.f32 %v681, 0.0
        %v750 = vmax.f32 %v684, 0.0
        %v751 = vmax.f32 %v686, 0.0
        %v752 = vld [vmem:[#allocation2] sm:$0xf]
        %753 = vadd.xlane.f32.xlu0 %v688
        %v754 = vpop.xlane.xlu0 %753
        %755 = vadd.xlane.f32.xlu0 %v689
        %v756 = vpop.xlane.xlu0 %755
        %757 = vadd.xlane.f32.xlu0 %v690
        %v758 = vpop.xlane.xlu0 %757
        %759 = vadd.xlane.f32.xlu0 %v691
        %v760 = vpop.xlane.xlu0 %759
        %761 = vadd.xlane.f32.xlu0 %v692
        %v762 = vpop.xlane.xlu0 %761
        %763 = vadd.xlane.f32.xlu0 %v693
        %v764 = vpop.xlane.xlu0 %763
        %765 = vadd.xlane.f32.xlu0 %v694
        %v766 = vpop.xlane.xlu0 %765
        %767 = vadd.xlane.f32.xlu0 %v695
        %v768 = vpop.xlane.xlu0 %767
        %769 = vadd.xlane.f32.xlu0 %v696
        %v770 = vpop.xlane.xlu0 %769
        %771 = vadd.xlane.f32.xlu0 %v697
        %v772 = vpop.xlane.xlu0 %771
        %773 = vadd.xlane.f32.xlu0 %v698
        %v774 = vpop.xlane.xlu0 %773
        %775 = vadd.xlane.f32.xlu0 %v699
        %v776 = vpop.xlane.xlu0 %775
        %777 = vadd.xlane.f32.xlu0 %v700
        %v778 = vpop.xlane.xlu0 %777
        %779 = vadd.xlane.f32.xlu0 %v701
        %v780 = vpop.xlane.xlu0 %779
        %781 = vadd.xlane.f32.xlu0 %v702
        %v782 = vpop.xlane.xlu0 %781
        %783 = vadd.xlane.f32.xlu0 %v703
        %v784 = vpop.xlane.xlu0 %783
        %785 = vadd.xlane.f32.xlu0 %v704
        %v786 = vpop.xlane.xlu0 %785
        %787 = vadd.xlane.f32.xlu0 %v705
        %v788 = vpop.xlane.xlu0 %787
        %789 = vadd.xlane.f32.xlu0 %v706
        %v790 = vpop.xlane.xlu0 %789
        %791 = vadd.xlane.f32.xlu0 %v707
        %v792 = vpop.xlane.xlu0 %791
        %793 = vadd.xlane.f32.xlu0 %v708
        %v794 = vpop.xlane.xlu0 %793
        %795 = vadd.xlane.f32.xlu0 %v709
        %v796 = vpop.xlane.xlu0 %795
        %797 = vadd.xlane.f32.xlu0 %v710
        %v798 = vpop.xlane.xlu0 %797
        %799 = vadd.xlane.f32.xlu0 %v711
        %v800 = vpop.xlane.xlu0 %799
        %801 = vadd.xlane.f32.xlu0 %v712
        %v802 = vpop.xlane.xlu0 %801
        %803 = vadd.xlane.f32.xlu0 %v713
        %v804 = vpop.xlane.xlu0 %803
        %805 = vadd.xlane.f32.xlu0 %v714
        %v806 = vpop.xlane.xlu0 %805
        %807 = vadd.xlane.f32.xlu0 %v715
        %v808 = vpop.xlane.xlu0 %807
        %809 = vadd.xlane.f32.xlu0 %v716
        %v810 = vpop.xlane.xlu0 %809
        %811 = vadd.xlane.f32.xlu0 %v717
        %v812 = vpop.xlane.xlu0 %811
        %813 = vadd.xlane.f32.xlu0 %v718
        %v814 = vpop.xlane.xlu0 %813
        %815 = vadd.xlane.f32.xlu0 %v719
        %v816 = vpop.xlane.xlu0 %815
        %817 = vadd.xlane.f32.xlu0 %v720
        %v818 = vpop.xlane.xlu0 %817
        %819 = vadd.xlane.f32.xlu0 %v721
        %v820 = vpop.xlane.xlu0 %819
        %821 = vadd.xlane.f32.xlu0 %v722
        %v822 = vpop.xlane.xlu0 %821
        %823 = vadd.xlane.f32.xlu0 %v723
        %v824 = vpop.xlane.xlu0 %823
        %825 = vadd.xlane.f32.xlu0 %v724
        %v826 = vpop.xlane.xlu0 %825
        %827 = vadd.xlane.f32.xlu0 %v725
        %v828 = vpop.xlane.xlu0 %827
        %829 = vadd.xlane.f32.xlu0 %v726
        %v830 = vpop.xlane.xlu0 %829
        %831 = vadd.xlane.f32.xlu0 %v727
        %v832 = vpop.xlane.xlu0 %831
        %833 = vadd.xlane.f32.xlu0 %v728
        %v834 = vpop.xlane.xlu0 %833
        %835 = vadd.xlane.f32.xlu0 %v729
        %v836 = vpop.xlane.xlu0 %835
        %837 = vadd.xlane.f32.xlu0 %v730
        %v838 = vpop.xlane.xlu0 %837
        %839 = vadd.xlane.f32.xlu0 %v731
        %v840 = vpop.xlane.xlu0 %839
        %841 = vadd.xlane.f32.xlu0 %v732
        %v842 = vpop.xlane.xlu0 %841
        %843 = vadd.xlane.f32.xlu0 %v733
        %v844 = vpop.xlane.xlu0 %843
        %845 = vadd.xlane.f32.xlu0 %v734
        %v846 = vpop.xlane.xlu0 %845
        %847 = vadd.xlane.f32.xlu0 %v735
        %v848 = vpop.xlane.xlu0 %847
        %849 = vadd.xlane.f32.xlu0 %v736
        %v850 = vpop.xlane.xlu0 %849
        %851 = vadd.xlane.f32.xlu0 %v737
        %v852 = vpop.xlane.xlu0 %851
        %853 = vadd.xlane.f32.xlu0 %v738
        %v854 = vpop.xlane.xlu0 %853
        %855 = vadd.xlane.f32.xlu0 %v739
        %v856 = vpop.xlane.xlu0 %855
        %857 = vadd.xlane.f32.xlu0 %v740
        %v858 = vpop.xlane.xlu0 %857
        %859 = vadd.xlane.f32.xlu0 %v741
        %v860 = vpop.xlane.xlu0 %859
        %861 = vadd.xlane.f32.xlu0 %v742
        %v862 = vpop.xlane.xlu0 %861
        %863 = vadd.xlane.f32.xlu0 %v743
        %v864 = vpop.xlane.xlu0 %863
        %865 = vadd.xlane.f32.xlu0 %v744
        %v866 = vpop.xlane.xlu0 %865
        %867 = vadd.xlane.f32.xlu0 %v745
        %v868 = vpop.xlane.xlu0 %867
        %869 = vadd.xlane.f32.xlu0 %v746
        %v870 = vpop.xlane.xlu0 %869
        %871 = vadd.xlane.f32.xlu0 %v747
        %v872 = vpop.xlane.xlu0 %871
        %873 = vadd.xlane.f32.xlu0 %v748
        %v874 = vpop.xlane.xlu0 %873
        %875 = vadd.xlane.f32.xlu0 %v749
        %v876 = vpop.xlane.xlu0 %875
        %877 = vadd.xlane.f32.xlu0 %v750
        %v878 = vpop.xlane.xlu0 %877
        %879 = vadd.xlane.f32.xlu0 %v751
        %v880 = vpop.xlane.xlu0 %879
        %v946 = vunpack.c.l.s4 269488144
        %v947 = vunpack.c.0.s8 %v946
        %v948 = vperm.slane %v754, %v947
        %v950 = vunpack.c.l.s4 842150450
        %v951 = vunpack.c.0.s8 %v950
        %v952 = vperm.slane %v754, %v951
        %v954 = vunpack.c.l.s4 1414812756
        %v955 = vunpack.c.0.s8 %v954
        %v956 = vperm.slane %v754, %v955
        %v958 = vunpack.c.l.s4 1987475062
        %v959 = vunpack.c.0.s8 %v958
        %v960 = vperm.slane %v754, %v959
        %v962 = vunpack.c.l.s4 269488144
        %v963 = vunpack.c.0.s8 %v962
        %v964 = vperm.slane %v756, %v963
        %v966 = vunpack.c.l.s4 842150450
        %v967 = vunpack.c.0.s8 %v966
        %v968 = vperm.slane %v756, %v967
        %v970 = vunpack.c.l.s4 1414812756
        %v971 = vunpack.c.0.s8 %v970
        %v972 = vperm.slane %v756, %v971
        %v974 = vunpack.c.l.s4 1987475062
        %v975 = vunpack.c.0.s8 %v974
        %v976 = vperm.slane %v756, %v975
        %v978 = vunpack.c.l.s4 269488144
        %v979 = vunpack.c.0.s8 %v978
        %v980 = vperm.slane %v758, %v979
        %v982 = vunpack.c.l.s4 842150450
        %v983 = vunpack.c.0.s8 %v982
        %v984 = vperm.slane %v758, %v983
        %v986 = vunpack.c.l.s4 1414812756
        %v987 = vunpack.c.0.s8 %v986
        %v988 = vperm.slane %v758, %v987
        %v990 = vunpack.c.l.s4 1987475062
        %v991 = vunpack.c.0.s8 %v990
        %v992 = vperm.slane %v758, %v991
        %v994 = vunpack.c.l.s4 269488144
        %v995 = vunpack.c.0.s8 %v994
        %v996 = vperm.slane %v760, %v995
        %v998 = vunpack.c.l.s4 842150450
        %v999 = vunpack.c.0.s8 %v998
        %v1000 = vperm.slane %v760, %v999
        %v1002 = vunpack.c.l.s4 1414812756
        %v1003 = vunpack.c.0.s8 %v1002
        %v1004 = vperm.slane %v760, %v1003
        %v1006 = vunpack.c.l.s4 1987475062
        %v1007 = vunpack.c.0.s8 %v1006
        %v1008 = vperm.slane %v760, %v1007
        %v1010 = vunpack.c.l.s4 269488144
        %v1011 = vunpack.c.0.s8 %v1010
        %v1012 = vperm.slane %v762, %v1011
        %v1014 = vunpack.c.l.s4 842150450
        %v1015 = vunpack.c.0.s8 %v1014
        %v1016 = vperm.slane %v762, %v1015
        %v1018 = vunpack.c.l.s4 1414812756
        %v1019 = vunpack.c.0.s8 %v1018
        %v1020 = vperm.slane %v762, %v1019
        %v1022 = vunpack.c.l.s4 1987475062
        %v1023 = vunpack.c.0.s8 %v1022
        %v1024 = vperm.slane %v762, %v1023
        %v1026 = vunpack.c.l.s4 269488144
        %v1027 = vunpack.c.0.s8 %v1026
        %v1028 = vperm.slane %v764, %v1027
        %v1030 = vunpack.c.l.s4 842150450
        %v1031 = vunpack.c.0.s8 %v1030
        %v1032 = vperm.slane %v764, %v1031
        %v1034 = vunpack.c.l.s4 1414812756
        %v1035 = vunpack.c.0.s8 %v1034
        %v1036 = vperm.slane %v764, %v1035
        %v1038 = vunpack.c.l.s4 1987475062
        %v1039 = vunpack.c.0.s8 %v1038
        %v1040 = vperm.slane %v764, %v1039
        %v1042 = vunpack.c.l.s4 269488144
        %v1043 = vunpack.c.0.s8 %v1042
        %v1044 = vperm.slane %v766, %v1043
        %v1046 = vunpack.c.l.s4 842150450
        %v1047 = vunpack.c.0.s8 %v1046
        %v1048 = vperm.slane %v766, %v1047
        %v1050 = vunpack.c.l.s4 1414812756
        %v1051 = vunpack.c.0.s8 %v1050
        %v1052 = vperm.slane %v766, %v1051
        %v1054 = vunpack.c.l.s4 1987475062
        %v1055 = vunpack.c.0.s8 %v1054
        %v1056 = vperm.slane %v766, %v1055
        %v1058 = vunpack.c.l.s4 269488144
        %v1059 = vunpack.c.0.s8 %v1058
        %v1060 = vperm.slane %v768, %v1059
        %v1062 = vunpack.c.l.s4 842150450
        %v1063 = vunpack.c.0.s8 %v1062
        %v1064 = vperm.slane %v768, %v1063
        %v1066 = vunpack.c.l.s4 1414812756
        %v1067 = vunpack.c.0.s8 %v1066
        %v1068 = vperm.slane %v768, %v1067
        %v1070 = vunpack.c.l.s4 1987475062
        %v1071 = vunpack.c.0.s8 %v1070
        %v1072 = vperm.slane %v768, %v1071
        %v1074 = vunpack.c.l.s4 269488144
        %v1075 = vunpack.c.0.s8 %v1074
        %v1076 = vperm.slane %v770, %v1075
        %v1078 = vunpack.c.l.s4 842150450
        %v1079 = vunpack.c.0.s8 %v1078
        %v1080 = vperm.slane %v770, %v1079
        %v1082 = vunpack.c.l.s4 1414812756
        %v1083 = vunpack.c.0.s8 %v1082
        %v1084 = vperm.slane %v770, %v1083
        %v1086 = vunpack.c.l.s4 1987475062
        %v1087 = vunpack.c.0.s8 %v1086
        %v1088 = vperm.slane %v770, %v1087
        %v1090 = vunpack.c.l.s4 269488144
        %v1091 = vunpack.c.0.s8 %v1090
        %v1092 = vperm.slane %v772, %v1091
        %v1094 = vunpack.c.l.s4 842150450
        %v1095 = vunpack.c.0.s8 %v1094
        %v1096 = vperm.slane %v772, %v1095
        %v1098 = vunpack.c.l.s4 1414812756
        %v1099 = vunpack.c.0.s8 %v1098
        %v1100 = vperm.slane %v772, %v1099
        %v1102 = vunpack.c.l.s4 1987475062
        %v1103 = vunpack.c.0.s8 %v1102
        %v1104 = vperm.slane %v772, %v1103
        %v1106 = vunpack.c.l.s4 269488144
        %v1107 = vunpack.c.0.s8 %v1106
        %v1108 = vperm.slane %v774, %v1107
        %v1110 = vunpack.c.l.s4 842150450
        %v1111 = vunpack.c.0.s8 %v1110
        %v1112 = vperm.slane %v774, %v1111
        %v1114 = vunpack.c.l.s4 1414812756
        %v1115 = vunpack.c.0.s8 %v1114
        %v1116 = vperm.slane %v774, %v1115
        %v1118 = vunpack.c.l.s4 1987475062
        %v1119 = vunpack.c.0.s8 %v1118
        %v1120 = vperm.slane %v774, %v1119
        %v1122 = vunpack.c.l.s4 269488144
        %v1123 = vunpack.c.0.s8 %v1122
        %v1124 = vperm.slane %v776, %v1123
        %v1126 = vunpack.c.l.s4 842150450
        %v1127 = vunpack.c.0.s8 %v1126
        %v1128 = vperm.slane %v776, %v1127
        %v1130 = vunpack.c.l.s4 1414812756
        %v1131 = vunpack.c.0.s8 %v1130
        %v1132 = vperm.slane %v776, %v1131
        %v1134 = vunpack.c.l.s4 1987475062
        %v1135 = vunpack.c.0.s8 %v1134
        %v1136 = vperm.slane %v776, %v1135
        %v1138 = vunpack.c.l.s4 269488144
        %v1139 = vunpack.c.0.s8 %v1138
        %v1140 = vperm.slane %v778, %v1139
        %v1142 = vunpack.c.l.s4 842150450
        %v1143 = vunpack.c.0.s8 %v1142
        %v1144 = vperm.slane %v778, %v1143
        %v1146 = vunpack.c.l.s4 1414812756
        %v1147 = vunpack.c.0.s8 %v1146
        %v1148 = vperm.slane %v778, %v1147
        %v1150 = vunpack.c.l.s4 1987475062
        %v1151 = vunpack.c.0.s8 %v1150
        %v1152 = vperm.slane %v778, %v1151
        %v1154 = vunpack.c.l.s4 269488144
        %v1155 = vunpack.c.0.s8 %v1154
        %v1156 = vperm.slane %v780, %v1155
        %v1158 = vunpack.c.l.s4 842150450
        %v1159 = vunpack.c.0.s8 %v1158
        %v1160 = vperm.slane %v780, %v1159
        %v1162 = vunpack.c.l.s4 1414812756
        %v1163 = vunpack.c.0.s8 %v1162
        %v1164 = vperm.slane %v780, %v1163
        %v1166 = vunpack.c.l.s4 1987475062
        %v1167 = vunpack.c.0.s8 %v1166
        %v1168 = vperm.slane %v780, %v1167
        %v1170 = vunpack.c.l.s4 269488144
        %v1171 = vunpack.c.0.s8 %v1170
        %v1172 = vperm.slane %v782, %v1171
        %v1174 = vunpack.c.l.s4 842150450
        %v1175 = vunpack.c.0.s8 %v1174
        %v1176 = vperm.slane %v782, %v1175
        %v1178 = vunpack.c.l.s4 1414812756
        %v1179 = vunpack.c.0.s8 %v1178
        %v1180 = vperm.slane %v782, %v1179
        %v1182 = vunpack.c.l.s4 1987475062
        %v1183 = vunpack.c.0.s8 %v1182
        %v1184 = vperm.slane %v782, %v1183
        %v1186 = vunpack.c.l.s4 269488144
        %v1187 = vunpack.c.0.s8 %v1186
        %v1188 = vperm.slane %v784, %v1187
        %v1190 = vunpack.c.l.s4 842150450
        %v1191 = vunpack.c.0.s8 %v1190
        %v1192 = vperm.slane %v784, %v1191
        %v1194 = vunpack.c.l.s4 1414812756
        %v1195 = vunpack.c.0.s8 %v1194
        %v1196 = vperm.slane %v784, %v1195
        %v1198 = vunpack.c.l.s4 1987475062
        %v1199 = vunpack.c.0.s8 %v1198
        %v1200 = vperm.slane %v784, %v1199
        %v1202 = vunpack.c.l.s4 269488144
        %v1203 = vunpack.c.0.s8 %v1202
        %v1204 = vperm.slane %v786, %v1203
        %v1206 = vunpack.c.l.s4 842150450
        %v1207 = vunpack.c.0.s8 %v1206
        %v1208 = vperm.slane %v786, %v1207
        %v1210 = vunpack.c.l.s4 1414812756
        %v1211 = vunpack.c.0.s8 %v1210
        %v1212 = vperm.slane %v786, %v1211
        %v1214 = vunpack.c.l.s4 1987475062
        %v1215 = vunpack.c.0.s8 %v1214
        %v1216 = vperm.slane %v786, %v1215
        %v1218 = vunpack.c.l.s4 269488144
        %v1219 = vunpack.c.0.s8 %v1218
        %v1220 = vperm.slane %v788, %v1219
        %v1222 = vunpack.c.l.s4 842150450
        %v1223 = vunpack.c.0.s8 %v1222
        %v1224 = vperm.slane %v788, %v1223
        %v1226 = vunpack.c.l.s4 1414812756
        %v1227 = vunpack.c.0.s8 %v1226
        %v1228 = vperm.slane %v788, %v1227
        %v1230 = vunpack.c.l.s4 1987475062
        %v1231 = vunpack.c.0.s8 %v1230
        %v1232 = vperm.slane %v788, %v1231
        %v1234 = vunpack.c.l.s4 269488144
        %v1235 = vunpack.c.0.s8 %v1234
        %v1236 = vperm.slane %v790, %v1235
        %v1238 = vunpack.c.l.s4 842150450
        %v1239 = vunpack.c.0.s8 %v1238
        %v1240 = vperm.slane %v790, %v1239
        %v1242 = vunpack.c.l.s4 1414812756
        %v1243 = vunpack.c.0.s8 %v1242
        %v1244 = vperm.slane %v790, %v1243
        %v1246 = vunpack.c.l.s4 1987475062
        %v1247 = vunpack.c.0.s8 %v1246
        %v1248 = vperm.slane %v790, %v1247
        %v1250 = vunpack.c.l.s4 269488144
        %v1251 = vunpack.c.0.s8 %v1250
        %v1252 = vperm.slane %v792, %v1251
        %v1254 = vunpack.c.l.s4 842150450
        %v1255 = vunpack.c.0.s8 %v1254
        %v1256 = vperm.slane %v792, %v1255
        %v1258 = vunpack.c.l.s4 1414812756
        %v1259 = vunpack.c.0.s8 %v1258
        %v1260 = vperm.slane %v792, %v1259
        %v1262 = vunpack.c.l.s4 1987475062
        %v1263 = vunpack.c.0.s8 %v1262
        %v1264 = vperm.slane %v792, %v1263
        %v1266 = vunpack.c.l.s4 269488144
        %v1267 = vunpack.c.0.s8 %v1266
        %v1268 = vperm.slane %v794, %v1267
        %v1270 = vunpack.c.l.s4 842150450
        %v1271 = vunpack.c.0.s8 %v1270
        %v1272 = vperm.slane %v794, %v1271
        %v1274 = vunpack.c.l.s4 1414812756
        %v1275 = vunpack.c.0.s8 %v1274
        %v1276 = vperm.slane %v794, %v1275
        %v1278 = vunpack.c.l.s4 1987475062
        %v1279 = vunpack.c.0.s8 %v1278
        %v1280 = vperm.slane %v794, %v1279
        %v1282 = vunpack.c.l.s4 269488144
        %v1283 = vunpack.c.0.s8 %v1282
        %v1284 = vperm.slane %v796, %v1283
        %v1286 = vunpack.c.l.s4 842150450
        %v1287 = vunpack.c.0.s8 %v1286
        %v1288 = vperm.slane %v796, %v1287
        %v1290 = vunpack.c.l.s4 1414812756
        %v1291 = vunpack.c.0.s8 %v1290
        %v1292 = vperm.slane %v796, %v1291
        %v1294 = vunpack.c.l.s4 1987475062
        %v1295 = vunpack.c.0.s8 %v1294
        %v1296 = vperm.slane %v796, %v1295
        %v1298 = vunpack.c.l.s4 269488144
        %v1299 = vunpack.c.0.s8 %v1298
        %v1300 = vperm.slane %v798, %v1299
        %v1302 = vunpack.c.l.s4 842150450
        %v1303 = vunpack.c.0.s8 %v1302
        %v1304 = vperm.slane %v798, %v1303
        %v1306 = vunpack.c.l.s4 1414812756
        %v1307 = vunpack.c.0.s8 %v1306
        %v1308 = vperm.slane %v798, %v1307
        %v1310 = vunpack.c.l.s4 1987475062
        %v1311 = vunpack.c.0.s8 %v1310
        %v1312 = vperm.slane %v798, %v1311
        %v1314 = vunpack.c.l.s4 269488144
        %v1315 = vunpack.c.0.s8 %v1314
        %v1316 = vperm.slane %v800, %v1315
        %v1318 = vunpack.c.l.s4 842150450
        %v1319 = vunpack.c.0.s8 %v1318
        %v1320 = vperm.slane %v800, %v1319
        %v1322 = vunpack.c.l.s4 1414812756
        %v1323 = vunpack.c.0.s8 %v1322
        %v1324 = vperm.slane %v800, %v1323
        %v1326 = vunpack.c.l.s4 1987475062
        %v1327 = vunpack.c.0.s8 %v1326
        %v1328 = vperm.slane %v800, %v1327
        %v1330 = vunpack.c.l.s4 269488144
        %v1331 = vunpack.c.0.s8 %v1330
        %v1332 = vperm.slane %v802, %v1331
        %v1334 = vunpack.c.l.s4 842150450
        %v1335 = vunpack.c.0.s8 %v1334
        %v1336 = vperm.slane %v802, %v1335
        %v1338 = vunpack.c.l.s4 1414812756
        %v1339 = vunpack.c.0.s8 %v1338
        %v1340 = vperm.slane %v802, %v1339
        %v1342 = vunpack.c.l.s4 1987475062
        %v1343 = vunpack.c.0.s8 %v1342
        %v1344 = vperm.slane %v802, %v1343
        %v1346 = vunpack.c.l.s4 269488144
        %v1347 = vunpack.c.0.s8 %v1346
        %v1348 = vperm.slane %v804, %v1347
        %v1350 = vunpack.c.l.s4 842150450
        %v1351 = vunpack.c.0.s8 %v1350
        %v1352 = vperm.slane %v804, %v1351
        %v1354 = vunpack.c.l.s4 1414812756
        %v1355 = vunpack.c.0.s8 %v1354
        %v1356 = vperm.slane %v804, %v1355
        %v1358 = vunpack.c.l.s4 1987475062
        %v1359 = vunpack.c.0.s8 %v1358
        %v1360 = vperm.slane %v804, %v1359
        %v1362 = vunpack.c.l.s4 269488144
        %v1363 = vunpack.c.0.s8 %v1362
        %v1364 = vperm.slane %v806, %v1363
        %v1366 = vunpack.c.l.s4 842150450
        %v1367 = vunpack.c.0.s8 %v1366
        %v1368 = vperm.slane %v806, %v1367
        %v1370 = vunpack.c.l.s4 1414812756
        %v1371 = vunpack.c.0.s8 %v1370
        %v1372 = vperm.slane %v806, %v1371
        %v1374 = vunpack.c.l.s4 1987475062
        %v1375 = vunpack.c.0.s8 %v1374
        %v1376 = vperm.slane %v806, %v1375
        %v1378 = vunpack.c.l.s4 269488144
        %v1379 = vunpack.c.0.s8 %v1378
        %v1380 = vperm.slane %v808, %v1379
        %v1382 = vunpack.c.l.s4 842150450
        %v1383 = vunpack.c.0.s8 %v1382
        %v1384 = vperm.slane %v808, %v1383
        %v1386 = vunpack.c.l.s4 1414812756
        %v1387 = vunpack.c.0.s8 %v1386
        %v1388 = vperm.slane %v808, %v1387
        %v1390 = vunpack.c.l.s4 1987475062
        %v1391 = vunpack.c.0.s8 %v1390
        %v1392 = vperm.slane %v808, %v1391
        %v1394 = vunpack.c.l.s4 269488144
        %v1395 = vunpack.c.0.s8 %v1394
        %v1396 = vperm.slane %v810, %v1395
        %v1398 = vunpack.c.l.s4 842150450
        %v1399 = vunpack.c.0.s8 %v1398
        %v1400 = vperm.slane %v810, %v1399
        %v1402 = vunpack.c.l.s4 1414812756
        %v1403 = vunpack.c.0.s8 %v1402
        %v1404 = vperm.slane %v810, %v1403
        %v1406 = vunpack.c.l.s4 1987475062
        %v1407 = vunpack.c.0.s8 %v1406
        %v1408 = vperm.slane %v810, %v1407
        %v1410 = vunpack.c.l.s4 269488144
        %v1411 = vunpack.c.0.s8 %v1410
        %v1412 = vperm.slane %v812, %v1411
        %v1414 = vunpack.c.l.s4 842150450
        %v1415 = vunpack.c.0.s8 %v1414
        %v1416 = vperm.slane %v812, %v1415
        %v1418 = vunpack.c.l.s4 1414812756
        %v1419 = vunpack.c.0.s8 %v1418
        %v1420 = vperm.slane %v812, %v1419
        %v1422 = vunpack.c.l.s4 1987475062
        %v1423 = vunpack.c.0.s8 %v1422
        %v1424 = vperm.slane %v812, %v1423
        %v1426 = vunpack.c.l.s4 269488144
        %v1427 = vunpack.c.0.s8 %v1426
        %v1428 = vperm.slane %v814, %v1427
        %v1430 = vunpack.c.l.s4 842150450
        %v1431 = vunpack.c.0.s8 %v1430
        %v1432 = vperm.slane %v814, %v1431
        %v1434 = vunpack.c.l.s4 1414812756
        %v1435 = vunpack.c.0.s8 %v1434
        %v1436 = vperm.slane %v814, %v1435
        %v1438 = vunpack.c.l.s4 1987475062
        %v1439 = vunpack.c.0.s8 %v1438
        %v1440 = vperm.slane %v814, %v1439
        %v1442 = vunpack.c.l.s4 269488144
        %v1443 = vunpack.c.0.s8 %v1442
        %v1444 = vperm.slane %v816, %v1443
        %v1446 = vunpack.c.l.s4 842150450
        %v1447 = vunpack.c.0.s8 %v1446
        %v1448 = vperm.slane %v816, %v1447
        %v1450 = vunpack.c.l.s4 1414812756
        %v1451 = vunpack.c.0.s8 %v1450
        %v1452 = vperm.slane %v816, %v1451
        %v1454 = vunpack.c.l.s4 1987475062
        %v1455 = vunpack.c.0.s8 %v1454
        %v1456 = vperm.slane %v816, %v1455
        %v1458 = vunpack.c.l.s4 269488144
        %v1459 = vunpack.c.0.s8 %v1458
        %v1460 = vperm.slane %v818, %v1459
        %v1462 = vunpack.c.l.s4 842150450
        %v1463 = vunpack.c.0.s8 %v1462
        %v1464 = vperm.slane %v818, %v1463
        %v1466 = vunpack.c.l.s4 1414812756
        %v1467 = vunpack.c.0.s8 %v1466
        %v1468 = vperm.slane %v818, %v1467
        %v1470 = vunpack.c.l.s4 1987475062
        %v1471 = vunpack.c.0.s8 %v1470
        %v1472 = vperm.slane %v818, %v1471
        %v1474 = vunpack.c.l.s4 269488144
        %v1475 = vunpack.c.0.s8 %v1474
        %v1476 = vperm.slane %v820, %v1475
        %v1478 = vunpack.c.l.s4 842150450
        %v1479 = vunpack.c.0.s8 %v1478
        %v1480 = vperm.slane %v820, %v1479
        %v1482 = vunpack.c.l.s4 1414812756
        %v1483 = vunpack.c.0.s8 %v1482
        %v1484 = vperm.slane %v820, %v1483
        %v1486 = vunpack.c.l.s4 1987475062
        %v1487 = vunpack.c.0.s8 %v1486
        %v1488 = vperm.slane %v820, %v1487
        %v1490 = vunpack.c.l.s4 269488144
        %v1491 = vunpack.c.0.s8 %v1490
        %v1492 = vperm.slane %v822, %v1491
        %v1494 = vunpack.c.l.s4 842150450
        %v1495 = vunpack.c.0.s8 %v1494
        %v1496 = vperm.slane %v822, %v1495
        %v1498 = vunpack.c.l.s4 1414812756
        %v1499 = vunpack.c.0.s8 %v1498
        %v1500 = vperm.slane %v822, %v1499
        %v1502 = vunpack.c.l.s4 1987475062
        %v1503 = vunpack.c.0.s8 %v1502
        %v1504 = vperm.slane %v822, %v1503
        %v1506 = vunpack.c.l.s4 269488144
        %v1507 = vunpack.c.0.s8 %v1506
        %v1508 = vperm.slane %v824, %v1507
        %v1510 = vunpack.c.l.s4 842150450
        %v1511 = vunpack.c.0.s8 %v1510
        %v1512 = vperm.slane %v824, %v1511
        %v1514 = vunpack.c.l.s4 1414812756
        %v1515 = vunpack.c.0.s8 %v1514
        %v1516 = vperm.slane %v824, %v1515
        %v1518 = vunpack.c.l.s4 1987475062
        %v1519 = vunpack.c.0.s8 %v1518
        %v1520 = vperm.slane %v824, %v1519
        %v1522 = vunpack.c.l.s4 269488144
        %v1523 = vunpack.c.0.s8 %v1522
        %v1524 = vperm.slane %v826, %v1523
        %v1526 = vunpack.c.l.s4 842150450
        %v1527 = vunpack.c.0.s8 %v1526
        %v1528 = vperm.slane %v826, %v1527
        %v1530 = vunpack.c.l.s4 1414812756
        %v1531 = vunpack.c.0.s8 %v1530
        %v1532 = vperm.slane %v826, %v1531
        %v1534 = vunpack.c.l.s4 1987475062
        %v1535 = vunpack.c.0.s8 %v1534
        %v1536 = vperm.slane %v826, %v1535
        %v1538 = vunpack.c.l.s4 269488144
        %v1539 = vunpack.c.0.s8 %v1538
        %v1540 = vperm.slane %v828, %v1539
        %v1542 = vunpack.c.l.s4 842150450
        %v1543 = vunpack.c.0.s8 %v1542
        %v1544 = vperm.slane %v828, %v1543
        %v1546 = vunpack.c.l.s4 1414812756
        %v1547 = vunpack.c.0.s8 %v1546
        %v1548 = vperm.slane %v828, %v1547
        %v1550 = vunpack.c.l.s4 1987475062
        %v1551 = vunpack.c.0.s8 %v1550
        %v1552 = vperm.slane %v828, %v1551
        %v1554 = vunpack.c.l.s4 269488144
        %v1555 = vunpack.c.0.s8 %v1554
        %v1556 = vperm.slane %v830, %v1555
        %v1558 = vunpack.c.l.s4 842150450
        %v1559 = vunpack.c.0.s8 %v1558
        %v1560 = vperm.slane %v830, %v1559
        %v1562 = vunpack.c.l.s4 1414812756
        %v1563 = vunpack.c.0.s8 %v1562
        %v1564 = vperm.slane %v830, %v1563
        %v1566 = vunpack.c.l.s4 1987475062
        %v1567 = vunpack.c.0.s8 %v1566
        %v1568 = vperm.slane %v830, %v1567
        %v1570 = vunpack.c.l.s4 269488144
        %v1571 = vunpack.c.0.s8 %v1570
        %v1572 = vperm.slane %v832, %v1571
        %v1574 = vunpack.c.l.s4 842150450
        %v1575 = vunpack.c.0.s8 %v1574
        %v1576 = vperm.slane %v832, %v1575
        %v1578 = vunpack.c.l.s4 1414812756
        %v1579 = vunpack.c.0.s8 %v1578
        %v1580 = vperm.slane %v832, %v1579
        %v1582 = vunpack.c.l.s4 1987475062
        %v1583 = vunpack.c.0.s8 %v1582
        %v1584 = vperm.slane %v832, %v1583
        %v1586 = vunpack.c.l.s4 269488144
        %v1587 = vunpack.c.0.s8 %v1586
        %v1588 = vperm.slane %v834, %v1587
        %v1590 = vunpack.c.l.s4 842150450
        %v1591 = vunpack.c.0.s8 %v1590
        %v1592 = vperm.slane %v834, %v1591
        %v1594 = vunpack.c.l.s4 1414812756
        %v1595 = vunpack.c.0.s8 %v1594
        %v1596 = vperm.slane %v834, %v1595
        %v1598 = vunpack.c.l.s4 1987475062
        %v1599 = vunpack.c.0.s8 %v1598
        %v1600 = vperm.slane %v834, %v1599
        %v1602 = vunpack.c.l.s4 269488144
        %v1603 = vunpack.c.0.s8 %v1602
        %v1604 = vperm.slane %v836, %v1603
        %v1606 = vunpack.c.l.s4 842150450
        %v1607 = vunpack.c.0.s8 %v1606
        %v1608 = vperm.slane %v836, %v1607
        %v1610 = vunpack.c.l.s4 1414812756
        %v1611 = vunpack.c.0.s8 %v1610
        %v1612 = vperm.slane %v836, %v1611
        %v1614 = vunpack.c.l.s4 1987475062
        %v1615 = vunpack.c.0.s8 %v1614
        %v1616 = vperm.slane %v836, %v1615
        %v1618 = vunpack.c.l.s4 269488144
        %v1619 = vunpack.c.0.s8 %v1618
        %v1620 = vperm.slane %v838, %v1619
        %v1622 = vunpack.c.l.s4 842150450
        %v1623 = vunpack.c.0.s8 %v1622
        %v1624 = vperm.slane %v838, %v1623
        %v1626 = vunpack.c.l.s4 1414812756
        %v1627 = vunpack.c.0.s8 %v1626
        %v1628 = vperm.slane %v838, %v1627
        %v1630 = vunpack.c.l.s4 1987475062
        %v1631 = vunpack.c.0.s8 %v1630
        %v1632 = vperm.slane %v838, %v1631
        %v1634 = vunpack.c.l.s4 269488144
        %v1635 = vunpack.c.0.s8 %v1634
        %v1636 = vperm.slane %v840, %v1635
        %v1638 = vunpack.c.l.s4 842150450
        %v1639 = vunpack.c.0.s8 %v1638
        %v1640 = vperm.slane %v840, %v1639
        %v1642 = vunpack.c.l.s4 1414812756
        %v1643 = vunpack.c.0.s8 %v1642
        %v1644 = vperm.slane %v840, %v1643
        %v1646 = vunpack.c.l.s4 1987475062
        %v1647 = vunpack.c.0.s8 %v1646
        %v1648 = vperm.slane %v840, %v1647
        %v1650 = vunpack.c.l.s4 269488144
        %v1651 = vunpack.c.0.s8 %v1650
        %v1652 = vperm.slane %v842, %v1651
        %v1654 = vunpack.c.l.s4 842150450
        %v1655 = vunpack.c.0.s8 %v1654
        %v1656 = vperm.slane %v842, %v1655
        %v1658 = vunpack.c.l.s4 1414812756
        %v1659 = vunpack.c.0.s8 %v1658
        %v1660 = vperm.slane %v842, %v1659
        %v1662 = vunpack.c.l.s4 1987475062
        %v1663 = vunpack.c.0.s8 %v1662
        %v1664 = vperm.slane %v842, %v1663
        %v1666 = vunpack.c.l.s4 269488144
        %v1667 = vunpack.c.0.s8 %v1666
        %v1668 = vperm.slane %v844, %v1667
        %v1670 = vunpack.c.l.s4 842150450
        %v1671 = vunpack.c.0.s8 %v1670
        %v1672 = vperm.slane %v844, %v1671
        %v1674 = vunpack.c.l.s4 1414812756
        %v1675 = vunpack.c.0.s8 %v1674
        %v1676 = vperm.slane %v844, %v1675
        %v1678 = vunpack.c.l.s4 1987475062
        %v1679 = vunpack.c.0.s8 %v1678
        %v1680 = vperm.slane %v844, %v1679
        %v1682 = vunpack.c.l.s4 269488144
        %v1683 = vunpack.c.0.s8 %v1682
        %v1684 = vperm.slane %v846, %v1683
        %v1686 = vunpack.c.l.s4 842150450
        %v1687 = vunpack.c.0.s8 %v1686
        %v1688 = vperm.slane %v846, %v1687
        %v1690 = vunpack.c.l.s4 1414812756
        %v1691 = vunpack.c.0.s8 %v1690
        %v1692 = vperm.slane %v846, %v1691
        %v1694 = vunpack.c.l.s4 1987475062
        %v1695 = vunpack.c.0.s8 %v1694
        %v1696 = vperm.slane %v846, %v1695
        %v1698 = vunpack.c.l.s4 269488144
        %v1699 = vunpack.c.0.s8 %v1698
        %v1700 = vperm.slane %v848, %v1699
        %v1702 = vunpack.c.l.s4 842150450
        %v1703 = vunpack.c.0.s8 %v1702
        %v1704 = vperm.slane %v848, %v1703
        %v1706 = vunpack.c.l.s4 1414812756
        %v1707 = vunpack.c.0.s8 %v1706
        %v1708 = vperm.slane %v848, %v1707
        %v1710 = vunpack.c.l.s4 1987475062
        %v1711 = vunpack.c.0.s8 %v1710
        %v1712 = vperm.slane %v848, %v1711
        %v1714 = vunpack.c.l.s4 269488144
        %v1715 = vunpack.c.0.s8 %v1714
        %v1716 = vperm.slane %v850, %v1715
        %v1718 = vunpack.c.l.s4 842150450
        %v1719 = vunpack.c.0.s8 %v1718
        %v1720 = vperm.slane %v850, %v1719
        %v1722 = vunpack.c.l.s4 1414812756
        %v1723 = vunpack.c.0.s8 %v1722
        %v1724 = vperm.slane %v850, %v1723
        %v1726 = vunpack.c.l.s4 1987475062
        %v1727 = vunpack.c.0.s8 %v1726
        %v1728 = vperm.slane %v850, %v1727
        %v1730 = vunpack.c.l.s4 269488144
        %v1731 = vunpack.c.0.s8 %v1730
        %v1732 = vperm.slane %v852, %v1731
        %v1734 = vunpack.c.l.s4 842150450
        %v1735 = vunpack.c.0.s8 %v1734
        %v1736 = vperm.slane %v852, %v1735
        %v1738 = vunpack.c.l.s4 1414812756
        %v1739 = vunpack.c.0.s8 %v1738
        %v1740 = vperm.slane %v852, %v1739
        %v1742 = vunpack.c.l.s4 1987475062
        %v1743 = vunpack.c.0.s8 %v1742
        %v1744 = vperm.slane %v852, %v1743
        %v1746 = vunpack.c.l.s4 269488144
        %v1747 = vunpack.c.0.s8 %v1746
        %v1748 = vperm.slane %v854, %v1747
        %v1750 = vunpack.c.l.s4 842150450
        %v1751 = vunpack.c.0.s8 %v1750
        %v1752 = vperm.slane %v854, %v1751
        %v1754 = vunpack.c.l.s4 1414812756
        %v1755 = vunpack.c.0.s8 %v1754
        %v1756 = vperm.slane %v854, %v1755
        %v1758 = vunpack.c.l.s4 1987475062
        %v1759 = vunpack.c.0.s8 %v1758
        %v1760 = vperm.slane %v854, %v1759
        %v1762 = vunpack.c.l.s4 269488144
        %v1763 = vunpack.c.0.s8 %v1762
        %v1764 = vperm.slane %v856, %v1763
        %v1766 = vunpack.c.l.s4 842150450
        %v1767 = vunpack.c.0.s8 %v1766
        %v1768 = vperm.slane %v856, %v1767
        %v1770 = vunpack.c.l.s4 1414812756
        %v1771 = vunpack.c.0.s8 %v1770
        %v1772 = vperm.slane %v856, %v1771
        %v1774 = vunpack.c.l.s4 1987475062
        %v1775 = vunpack.c.0.s8 %v1774
        %v1776 = vperm.slane %v856, %v1775
        %v1778 = vunpack.c.l.s4 269488144
        %v1779 = vunpack.c.0.s8 %v1778
        %v1780 = vperm.slane %v858, %v1779
        %v1782 = vunpack.c.l.s4 842150450
        %v1783 = vunpack.c.0.s8 %v1782
        %v1784 = vperm.slane %v858, %v1783
        %v1786 = vunpack.c.l.s4 1414812756
        %v1787 = vunpack.c.0.s8 %v1786
        %v1788 = vperm.slane %v858, %v1787
        %v1790 = vunpack.c.l.s4 1987475062
        %v1791 = vunpack.c.0.s8 %v1790
        %v1792 = vperm.slane %v858, %v1791
        %v1794 = vunpack.c.l.s4 269488144
        %v1795 = vunpack.c.0.s8 %v1794
        %v1796 = vperm.slane %v860, %v1795
        %v1798 = vunpack.c.l.s4 842150450
        %v1799 = vunpack.c.0.s8 %v1798
        %v1800 = vperm.slane %v860, %v1799
        %v1802 = vunpack.c.l.s4 1414812756
        %v1803 = vunpack.c.0.s8 %v1802
        %v1804 = vperm.slane %v860, %v1803
        %v1806 = vunpack.c.l.s4 1987475062
        %v1807 = vunpack.c.0.s8 %v1806
        %v1808 = vperm.slane %v860, %v1807
        %v1810 = vunpack.c.l.s4 269488144
        %v1811 = vunpack.c.0.s8 %v1810
        %v1812 = vperm.slane %v862, %v1811
        %v1814 = vunpack.c.l.s4 842150450
        %v1815 = vunpack.c.0.s8 %v1814
        %v1816 = vperm.slane %v862, %v1815
        %v1818 = vunpack.c.l.s4 1414812756
        %v1819 = vunpack.c.0.s8 %v1818
        %v1820 = vperm.slane %v862, %v1819
        %v1822 = vunpack.c.l.s4 1987475062
        %v1823 = vunpack.c.0.s8 %v1822
        %v1824 = vperm.slane %v862, %v1823
        %v1826 = vunpack.c.l.s4 269488144
        %v1827 = vunpack.c.0.s8 %v1826
        %v1828 = vperm.slane %v864, %v1827
        %v1830 = vunpack.c.l.s4 842150450
        %v1831 = vunpack.c.0.s8 %v1830
        %v1832 = vperm.slane %v864, %v1831
        %v1834 = vunpack.c.l.s4 1414812756
        %v1835 = vunpack.c.0.s8 %v1834
        %v1836 = vperm.slane %v864, %v1835
        %v1838 = vunpack.c.l.s4 1987475062
        %v1839 = vunpack.c.0.s8 %v1838
        %v1840 = vperm.slane %v864, %v1839
        %v1842 = vunpack.c.l.s4 269488144
        %v1843 = vunpack.c.0.s8 %v1842
        %v1844 = vperm.slane %v866, %v1843
        %v1846 = vunpack.c.l.s4 842150450
        %v1847 = vunpack.c.0.s8 %v1846
        %v1848 = vperm.slane %v866, %v1847
        %v1850 = vunpack.c.l.s4 1414812756
        %v1851 = vunpack.c.0.s8 %v1850
        %v1852 = vperm.slane %v866, %v1851
        %v1854 = vunpack.c.l.s4 1987475062
        %v1855 = vunpack.c.0.s8 %v1854
        %v1856 = vperm.slane %v866, %v1855
        %v1858 = vunpack.c.l.s4 269488144
        %v1859 = vunpack.c.0.s8 %v1858
        %v1860 = vperm.slane %v868, %v1859
        %v1862 = vunpack.c.l.s4 842150450
        %v1863 = vunpack.c.0.s8 %v1862
        %v1864 = vperm.slane %v868, %v1863
        %v1866 = vunpack.c.l.s4 1414812756
        %v1867 = vunpack.c.0.s8 %v1866
        %v1868 = vperm.slane %v868, %v1867
        %v1870 = vunpack.c.l.s4 1987475062
        %v1871 = vunpack.c.0.s8 %v1870
        %v1872 = vperm.slane %v868, %v1871
        %v1874 = vunpack.c.l.s4 269488144
        %v1875 = vunpack.c.0.s8 %v1874
        %v1876 = vperm.slane %v870, %v1875
        %v1878 = vunpack.c.l.s4 842150450
        %v1879 = vunpack.c.0.s8 %v1878
        %v1880 = vperm.slane %v870, %v1879
        %v1882 = vunpack.c.l.s4 1414812756
        %v1883 = vunpack.c.0.s8 %v1882
        %v1884 = vperm.slane %v870, %v1883
        %v1886 = vunpack.c.l.s4 1987475062
        %v1887 = vunpack.c.0.s8 %v1886
        %v1888 = vperm.slane %v870, %v1887
        %v1890 = vunpack.c.l.s4 269488144
        %v1891 = vunpack.c.0.s8 %v1890
        %v1892 = vperm.slane %v872, %v1891
        %v1894 = vunpack.c.l.s4 842150450
        %v1895 = vunpack.c.0.s8 %v1894
        %v1896 = vperm.slane %v872, %v1895
        %v1898 = vunpack.c.l.s4 1414812756
        %v1899 = vunpack.c.0.s8 %v1898
        %v1900 = vperm.slane %v872, %v1899
        %v1902 = vunpack.c.l.s4 1987475062
        %v1903 = vunpack.c.0.s8 %v1902
        %v1904 = vperm.slane %v872, %v1903
        %v1906 = vunpack.c.l.s4 269488144
        %v1907 = vunpack.c.0.s8 %v1906
        %v1908 = vperm.slane %v874, %v1907
        %v1910 = vunpack.c.l.s4 842150450
        %v1911 = vunpack.c.0.s8 %v1910
        %v1912 = vperm.slane %v874, %v1911
        %v1914 = vunpack.c.l.s4 1414812756
        %v1915 = vunpack.c.0.s8 %v1914
        %v1916 = vperm.slane %v874, %v1915
        %v1918 = vunpack.c.l.s4 1987475062
        %v1919 = vunpack.c.0.s8 %v1918
        %v1920 = vperm.slane %v874, %v1919
        %v1922 = vunpack.c.l.s4 269488144
        %v1923 = vunpack.c.0.s8 %v1922
        %v1924 = vperm.slane %v876, %v1923
        %v1926 = vunpack.c.l.s4 842150450
        %v1927 = vunpack.c.0.s8 %v1926
        %v1928 = vperm.slane %v876, %v1927
        %v1930 = vunpack.c.l.s4 1414812756
        %v1931 = vunpack.c.0.s8 %v1930
        %v1932 = vperm.slane %v876, %v1931
        %v1934 = vunpack.c.l.s4 1987475062
        %v1935 = vunpack.c.0.s8 %v1934
        %v1936 = vperm.slane %v876, %v1935
        %v1938 = vunpack.c.l.s4 269488144
        %v1939 = vunpack.c.0.s8 %v1938
        %v1940 = vperm.slane %v878, %v1939
        %v1942 = vunpack.c.l.s4 842150450
        %v1943 = vunpack.c.0.s8 %v1942
        %v1944 = vperm.slane %v878, %v1943
        %v1946 = vunpack.c.l.s4 1414812756
        %v1947 = vunpack.c.0.s8 %v1946
        %v1948 = vperm.slane %v878, %v1947
        %v1950 = vunpack.c.l.s4 1987475062
        %v1951 = vunpack.c.0.s8 %v1950
        %v1952 = vperm.slane %v878, %v1951
        %v1954 = vunpack.c.l.s4 269488144
        %v1955 = vunpack.c.0.s8 %v1954
        %v1956 = vperm.slane %v880, %v1955
        %v1958 = vunpack.c.l.s4 842150450
        %v1959 = vunpack.c.0.s8 %v1958
        %v1960 = vperm.slane %v880, %v1959
        %v1962 = vunpack.c.l.s4 1414812756
        %v1963 = vunpack.c.0.s8 %v1962
        %v1964 = vperm.slane %v880, %v1963
        %v1966 = vunpack.c.l.s4 1987475062
        %v1967 = vunpack.c.0.s8 %v1966
        %v1968 = vperm.slane %v880, %v1967
        %1969 = vst [vmem:[#allocation1] ss:$4 sm:$0xff] %v948
        %s1970 = scalar_lea.vmem [#allocation1], 1
        %1971 = vst [vmem:[%s1970] ss:$4 sm:$0xff] %v952
        %s1972 = scalar_lea.vmem [#allocation1], 2
        %1973 = vst [vmem:[%s1972] ss:$4 sm:$0xff] %v956
        %s1974 = scalar_lea.vmem [#allocation1], 3
        %1975 = vst [vmem:[%s1974] ss:$4 sm:$0xff] %v960
        %s1976 = scalar_lea.vmem [#allocation1], 32
        %1977 = vst [vmem:[%s1976] ss:$4 sm:$0xff] %v964
        %s1978 = scalar_lea.vmem [#allocation1], 33
        %1979 = vst [vmem:[%s1978] ss:$4 sm:$0xff] %v968
        %s1980 = scalar_lea.vmem [#allocation1], 34
        %1981 = vst [vmem:[%s1980] ss:$4 sm:$0xff] %v972
        %s1982 = scalar_lea.vmem [#allocation1], 35
        %1983 = vst [vmem:[%s1982] ss:$4 sm:$0xff] %v976
        %v1984 = vld.sshfl [vmem:[#allocation1] sm:$0xff pattern:$0x73625140]
        %v1985 = vld.sshfl [vmem:[#allocation1 + $0x20] sm:$0xff pattern:$0x73625140]
        %1986 = vst [vmem:[#allocation1] ss:$4 sm:$0xff] %v980
        %1987 = vst [vmem:[%s1970] ss:$4 sm:$0xff] %v984
        %1988 = vst [vmem:[%s1972] ss:$4 sm:$0xff] %v988
        %1989 = vst [vmem:[%s1974] ss:$4 sm:$0xff] %v992
        %1990 = vst [vmem:[%s1976] ss:$4 sm:$0xff] %v996
        %1991 = vst [vmem:[%s1978] ss:$4 sm:$0xff] %v1000
        %1992 = vst [vmem:[%s1980] ss:$4 sm:$0xff] %v1004
        %1993 = vst [vmem:[%s1982] ss:$4 sm:$0xff] %v1008
        %v1994 = vld.sshfl [vmem:[#allocation1] sm:$0xff pattern:$0x73625140]
        %v1995 = vld.sshfl [vmem:[#allocation1 + $0x20] sm:$0xff pattern:$0x73625140]
        %1996 = vst [vmem:[#allocation1] ss:$4 sm:$0xff] %v1012
        %1997 = vst [vmem:[%s1970] ss:$4 sm:$0xff] %v1016
        %1998 = vst [vmem:[%s1972] ss:$4 sm:$0xff] %v1020
        %1999 = vst [vmem:[%s1974] ss:$4 sm:$0xff] %v1024
        %2000 = vst [vmem:[%s1976] ss:$4 sm:$0xff] %v1028
        %2001 = vst [vmem:[%s1978] ss:$4 sm:$0xff] %v1032
        %2002 = vst [vmem:[%s1980] ss:$4 sm:$0xff] %v1036
        %2003 = vst [vmem:[%s1982] ss:$4 sm:$0xff] %v1040
        %v2004 = vld.sshfl [vmem:[#allocation1] sm:$0xff pattern:$0x73625140]
        %v2005 = vld.sshfl [vmem:[#allocation1 + $0x20] sm:$0xff pattern:$0x73625140]
        %2006 = vst [vmem:[#allocation1] ss:$4 sm:$0xff] %v1044
        %2007 = vst [vmem:[%s1970] ss:$4 sm:$0xff] %v1048
        %2008 = vst [vmem:[%s1972] ss:$4 sm:$0xff] %v1052
        %2009 = vst [vmem:[%s1974] ss:$4 sm:$0xff] %v1056
        %2010 = vst [vmem:[%s1976] ss:$4 sm:$0xff] %v1060
        %2011 = vst [vmem:[%s1978] ss:$4 sm:$0xff] %v1064
        %2012 = vst [vmem:[%s1980] ss:$4 sm:$0xff] %v1068
        %2013 = vst [vmem:[%s1982] ss:$4 sm:$0xff] %v1072
        %v2014 = vld.sshfl [vmem:[#allocation1] sm:$0xff pattern:$0x73625140]
        %v2015 = vld.sshfl [vmem:[#allocation1 + $0x20] sm:$0xff pattern:$0x73625140]
        %2016 = vst [vmem:[#allocation1] ss:$4 sm:$0xff] %v1076
        %2017 = vst [vmem:[%s1970] ss:$4 sm:$0xff] %v1080
        %2018 = vst [vmem:[%s1972] ss:$4 sm:$0xff] %v1084
        %2019 = vst [vmem:[%s1974] ss:$4 sm:$0xff] %v1088
        %2020 = vst [vmem:[%s1976] ss:$4 sm:$0xff] %v1092
        %2021 = vst [vmem:[%s1978] ss:$4 sm:$0xff] %v1096
        %2022 = vst [vmem:[%s1980] ss:$4 sm:$0xff] %v1100
        %2023 = vst [vmem:[%s1982] ss:$4 sm:$0xff] %v1104
        %v2024 = vld.sshfl [vmem:[#allocation1] sm:$0xff pattern:$0x73625140]
        %v2025 = vld.sshfl [vmem:[#allocation1 + $0x20] sm:$0xff pattern:$0x73625140]
        %2026 = vst [vmem:[#allocation1] ss:$4 sm:$0xff] %v1108
        %2027 = vst [vmem:[%s1970] ss:$4 sm:$0xff] %v1112
        %2028 = vst [vmem:[%s1972] ss:$4 sm:$0xff] %v1116
        %2029 = vst [vmem:[%s1974] ss:$4 sm:$0xff] %v1120
        %2030 = vst [vmem:[%s1976] ss:$4 sm:$0xff] %v1124
        %2031 = vst [vmem:[%s1978] ss:$4 sm:$0xff] %v1128
        %2032 = vst [vmem:[%s1980] ss:$4 sm:$0xff] %v1132
        %2033 = vst [vmem:[%s1982] ss:$4 sm:$0xff] %v1136
        %v2034 = vld.sshfl [vmem:[#allocation1] sm:$0xff pattern:$0x73625140]
        %v2035 = vld.sshfl [vmem:[#allocation1 + $0x20] sm:$0xff pattern:$0x73625140]
        %2036 = vst [vmem:[#allocation1] ss:$4 sm:$0xff] %v1140
        %2037 = vst [vmem:[%s1970] ss:$4 sm:$0xff] %v1144
        %2038 = vst [vmem:[%s1972] ss:$4 sm:$0xff] %v1148
        %2039 = vst [vmem:[%s1974] ss:$4 sm:$0xff] %v1152
        %2040 = vst [vmem:[%s1976] ss:$4 sm:$0xff] %v1156
        %2041 = vst [vmem:[%s1978] ss:$4 sm:$0xff] %v1160
        %2042 = vst [vmem:[%s1980] ss:$4 sm:$0xff] %v1164
        %2043 = vst [vmem:[%s1982] ss:$4 sm:$0xff] %v1168
        %v2044 = vld.sshfl [vmem:[#allocation1] sm:$0xff pattern:$0x73625140]
        %v2045 = vld.sshfl [vmem:[#allocation1 + $0x20] sm:$0xff pattern:$0x73625140]
        %2046 = vst [vmem:[#allocation1] ss:$4 sm:$0xff] %v1172
        %2047 = vst [vmem:[%s1970] ss:$4 sm:$0xff] %v1176
        %2048 = vst [vmem:[%s1972] ss:$4 sm:$0xff] %v1180
        %2049 = vst [vmem:[%s1974] ss:$4 sm:$0xff] %v1184
        %2050 = vst [vmem:[%s1976] ss:$4 sm:$0xff] %v1188
        %2051 = vst [vmem:[%s1978] ss:$4 sm:$0xff] %v1192
        %2052 = vst [vmem:[%s1980] ss:$4 sm:$0xff] %v1196
        %2053 = vst [vmem:[%s1982] ss:$4 sm:$0xff] %v1200
        %v2054 = vld.sshfl [vmem:[#allocation1] sm:$0xff pattern:$0x73625140]
        %v2055 = vld.sshfl [vmem:[#allocation1 + $0x20] sm:$0xff pattern:$0x73625140]
        %2056 = vst [vmem:[#allocation1] ss:$4 sm:$0xff] %v1204
        %2057 = vst [vmem:[%s1970] ss:$4 sm:$0xff] %v1208
        %2058 = vst [vmem:[%s1972] ss:$4 sm:$0xff] %v1212
        %2059 = vst [vmem:[%s1974] ss:$4 sm:$0xff] %v1216
        %2060 = vst [vmem:[%s1976] ss:$4 sm:$0xff] %v1220
        %2061 = vst [vmem:[%s1978] ss:$4 sm:$0xff] %v1224
        %2062 = vst [vmem:[%s1980] ss:$4 sm:$0xff] %v1228
        %2063 = vst [vmem:[%s1982] ss:$4 sm:$0xff] %v1232
        %v2064 = vld.sshfl [vmem:[#allocation1] sm:$0xff pattern:$0x73625140]
        %v2065 = vld.sshfl [vmem:[#allocation1 + $0x20] sm:$0xff pattern:$0x73625140]
        %2066 = vst [vmem:[#allocation1] ss:$4 sm:$0xff] %v1236
        %2067 = vst [vmem:[%s1970] ss:$4 sm:$0xff] %v1240
        %2068 = vst [vmem:[%s1972] ss:$4 sm:$0xff] %v1244
        %2069 = vst [vmem:[%s1974] ss:$4 sm:$0xff] %v1248
        %2070 = vst [vmem:[%s1976] ss:$4 sm:$0xff] %v1252
        %2071 = vst [vmem:[%s1978] ss:$4 sm:$0xff] %v1256
        %2072 = vst [vmem:[%s1980] ss:$4 sm:$0xff] %v1260
        %2073 = vst [vmem:[%s1982] ss:$4 sm:$0xff] %v1264
        %v2074 = vld.sshfl [vmem:[#allocation1] sm:$0xff pattern:$0x73625140]
        %v2075 = vld.sshfl [vmem:[#allocation1 + $0x20] sm:$0xff pattern:$0x73625140]
        %2076 = vst [vmem:[#allocation1] ss:$4 sm:$0xff] %v1268
        %2077 = vst [vmem:[%s1970] ss:$4 sm:$0xff] %v1272
        %2078 = vst [vmem:[%s1972] ss:$4 sm:$0xff] %v1276
        %2079 = vst [vmem:[%s1974] ss:$4 sm:$0xff] %v1280
        %2080 = vst [vmem:[%s1976] ss:$4 sm:$0xff] %v1284
        %2081 = vst [vmem:[%s1978] ss:$4 sm:$0xff] %v1288
        %2082 = vst [vmem:[%s1980] ss:$4 sm:$0xff] %v1292
        %2083 = vst [vmem:[%s1982] ss:$4 sm:$0xff] %v1296
        %v2084 = vld.sshfl [vmem:[#allocation1] sm:$0xff pattern:$0x73625140]
        %v2085 = vld.sshfl [vmem:[#allocation1 + $0x20] sm:$0xff pattern:$0x73625140]
        %2086 = vst [vmem:[#allocation1] ss:$4 sm:$0xff] %v1300
        %2087 = vst [vmem:[%s1970] ss:$4 sm:$0xff] %v1304
        %2088 = vst [vmem:[%s1972] ss:$4 sm:$0xff] %v1308
        %2089 = vst [vmem:[%s1974] ss:$4 sm:$0xff] %v1312
        %2090 = vst [vmem:[%s1976] ss:$4 sm:$0xff] %v1316
        %2091 = vst [vmem:[%s1978] ss:$4 sm:$0xff] %v1320
        %2092 = vst [vmem:[%s1980] ss:$4 sm:$0xff] %v1324
        %2093 = vst [vmem:[%s1982] ss:$4 sm:$0xff] %v1328
        %v2094 = vld.sshfl [vmem:[#allocation1] sm:$0xff pattern:$0x73625140]
        %v2095 = vld.sshfl [vmem:[#allocation1 + $0x20] sm:$0xff pattern:$0x73625140]
        %2096 = vst [vmem:[#allocation1] ss:$4 sm:$0xff] %v1332
        %2097 = vst [vmem:[%s1970] ss:$4 sm:$0xff] %v1336
        %2098 = vst [vmem:[%s1972] ss:$4 sm:$0xff] %v1340
        %2099 = vst [vmem:[%s1974] ss:$4 sm:$0xff] %v1344
        %2100 = vst [vmem:[%s1976] ss:$4 sm:$0xff] %v1348
        %2101 = vst [vmem:[%s1978] ss:$4 sm:$0xff] %v1352
        %2102 = vst [vmem:[%s1980] ss:$4 sm:$0xff] %v1356
        %2103 = vst [vmem:[%s1982] ss:$4 sm:$0xff] %v1360
        %v2104 = vld.sshfl [vmem:[#allocation1] sm:$0xff pattern:$0x73625140]
        %v2105 = vld.sshfl [vmem:[#allocation1 + $0x20] sm:$0xff pattern:$0x73625140]
        %2106 = vst [vmem:[#allocation1] ss:$4 sm:$0xff] %v1364
        %2107 = vst [vmem:[%s1970] ss:$4 sm:$0xff] %v1368
        %2108 = vst [vmem:[%s1972] ss:$4 sm:$0xff] %v1372
        %2109 = vst [vmem:[%s1974] ss:$4 sm:$0xff] %v1376
        %2110 = vst [vmem:[%s1976] ss:$4 sm:$0xff] %v1380
        %2111 = vst [vmem:[%s1978] ss:$4 sm:$0xff] %v1384
        %2112 = vst [vmem:[%s1980] ss:$4 sm:$0xff] %v1388
        %2113 = vst [vmem:[%s1982] ss:$4 sm:$0xff] %v1392
        %v2114 = vld.sshfl [vmem:[#allocation1] sm:$0xff pattern:$0x73625140]
        %v2115 = vld.sshfl [vmem:[#allocation1 + $0x20] sm:$0xff pattern:$0x73625140]
        %2116 = vst [vmem:[#allocation1] ss:$4 sm:$0xff] %v1396
        %2117 = vst [vmem:[%s1970] ss:$4 sm:$0xff] %v1400
        %2118 = vst [vmem:[%s1972] ss:$4 sm:$0xff] %v1404
        %2119 = vst [vmem:[%s1974] ss:$4 sm:$0xff] %v1408
        %2120 = vst [vmem:[%s1976] ss:$4 sm:$0xff] %v1412
        %2121 = vst [vmem:[%s1978] ss:$4 sm:$0xff] %v1416
        %2122 = vst [vmem:[%s1980] ss:$4 sm:$0xff] %v1420
        %2123 = vst [vmem:[%s1982] ss:$4 sm:$0xff] %v1424
        %v2124 = vld.sshfl [vmem:[#allocation1] sm:$0xff pattern:$0x73625140]
        %v2125 = vld.sshfl [vmem:[#allocation1 + $0x20] sm:$0xff pattern:$0x73625140]
        %2126 = vst [vmem:[#allocation1] ss:$4 sm:$0xff] %v1428
        %2127 = vst [vmem:[%s1970] ss:$4 sm:$0xff] %v1432
        %2128 = vst [vmem:[%s1972] ss:$4 sm:$0xff] %v1436
        %2129 = vst [vmem:[%s1974] ss:$4 sm:$0xff] %v1440
        %2130 = vst [vmem:[%s1976] ss:$4 sm:$0xff] %v1444
        %2131 = vst [vmem:[%s1978] ss:$4 sm:$0xff] %v1448
        %2132 = vst [vmem:[%s1980] ss:$4 sm:$0xff] %v1452
        %2133 = vst [vmem:[%s1982] ss:$4 sm:$0xff] %v1456
        %v2134 = vld.sshfl [vmem:[#allocation1] sm:$0xff pattern:$0x73625140]
        %v2135 = vld.sshfl [vmem:[#allocation1 + $0x20] sm:$0xff pattern:$0x73625140]
        %2136 = vst [vmem:[#allocation1] ss:$4 sm:$0xff] %v1460
        %2137 = vst [vmem:[%s1970] ss:$4 sm:$0xff] %v1464
        %2138 = vst [vmem:[%s1972] ss:$4 sm:$0xff] %v1468
        %2139 = vst [vmem:[%s1974] ss:$4 sm:$0xff] %v1472
        %2140 = vst [vmem:[%s1976] ss:$4 sm:$0xff] %v1476
        %2141 = vst [vmem:[%s1978] ss:$4 sm:$0xff] %v1480
        %2142 = vst [vmem:[%s1980] ss:$4 sm:$0xff] %v1484
        %2143 = vst [vmem:[%s1982] ss:$4 sm:$0xff] %v1488
        %v2144 = vld.sshfl [vmem:[#allocation1] sm:$0xff pattern:$0x73625140]
        %v2145 = vld.sshfl [vmem:[#allocation1 + $0x20] sm:$0xff pattern:$0x73625140]
        %2146 = vst [vmem:[#allocation1] ss:$4 sm:$0xff] %v1492
        %2147 = vst [vmem:[%s1970] ss:$4 sm:$0xff] %v1496
        %2148 = vst [vmem:[%s1972] ss:$4 sm:$0xff] %v1500
        %2149 = vst [vmem:[%s1974] ss:$4 sm:$0xff] %v1504
        %2150 = vst [vmem:[%s1976] ss:$4 sm:$0xff] %v1508
        %2151 = vst [vmem:[%s1978] ss:$4 sm:$0xff] %v1512
        %2152 = vst [vmem:[%s1980] ss:$4 sm:$0xff] %v1516
        %2153 = vst [vmem:[%s1982] ss:$4 sm:$0xff] %v1520
        %v2154 = vld.sshfl [vmem:[#allocation1] sm:$0xff pattern:$0x73625140]
        %v2155 = vld.sshfl [vmem:[#allocation1 + $0x20] sm:$0xff pattern:$0x73625140]
        %2156 = vst [vmem:[#allocation1] ss:$4 sm:$0xff] %v1524
        %2157 = vst [vmem:[%s1970] ss:$4 sm:$0xff] %v1528
        %2158 = vst [vmem:[%s1972] ss:$4 sm:$0xff] %v1532
        %2159 = vst [vmem:[%s1974] ss:$4 sm:$0xff] %v1536
        %2160 = vst [vmem:[%s1976] ss:$4 sm:$0xff] %v1540
        %2161 = vst [vmem:[%s1978] ss:$4 sm:$0xff] %v1544
        %2162 = vst [vmem:[%s1980] ss:$4 sm:$0xff] %v1548
        %2163 = vst [vmem:[%s1982] ss:$4 sm:$0xff] %v1552
        %v2164 = vld.sshfl [vmem:[#allocation1] sm:$0xff pattern:$0x73625140]
        %v2165 = vld.sshfl [vmem:[#allocation1 + $0x20] sm:$0xff pattern:$0x73625140]
        %2166 = vst [vmem:[#allocation1] ss:$4 sm:$0xff] %v1556
        %2167 = vst [vmem:[%s1970] ss:$4 sm:$0xff] %v1560
        %2168 = vst [vmem:[%s1972] ss:$4 sm:$0xff] %v1564
        %2169 = vst [vmem:[%s1974] ss:$4 sm:$0xff] %v1568
        %2170 = vst [vmem:[%s1976] ss:$4 sm:$0xff] %v1572
        %2171 = vst [vmem:[%s1978] ss:$4 sm:$0xff] %v1576
        %2172 = vst [vmem:[%s1980] ss:$4 sm:$0xff] %v1580
        %2173 = vst [vmem:[%s1982] ss:$4 sm:$0xff] %v1584
        %v2174 = vld.sshfl [vmem:[#allocation1] sm:$0xff pattern:$0x73625140]
        %v2175 = vld.sshfl [vmem:[#allocation1 + $0x20] sm:$0xff pattern:$0x73625140]
        %2176 = vst [vmem:[#allocation1] ss:$4 sm:$0xff] %v1588
        %2177 = vst [vmem:[%s1970] ss:$4 sm:$0xff] %v1592
        %2178 = vst [vmem:[%s1972] ss:$4 sm:$0xff] %v1596
        %2179 = vst [vmem:[%s1974] ss:$4 sm:$0xff] %v1600
        %2180 = vst [vmem:[%s1976] ss:$4 sm:$0xff] %v1604
        %2181 = vst [vmem:[%s1978] ss:$4 sm:$0xff] %v1608
        %2182 = vst [vmem:[%s1980] ss:$4 sm:$0xff] %v1612
        %2183 = vst [vmem:[%s1982] ss:$4 sm:$0xff] %v1616
        %v2184 = vld.sshfl [vmem:[#allocation1] sm:$0xff pattern:$0x73625140]
        %v2185 = vld.sshfl [vmem:[#allocation1 + $0x20] sm:$0xff pattern:$0x73625140]
        %2186 = vst [vmem:[#allocation1] ss:$4 sm:$0xff] %v1620
        %2187 = vst [vmem:[%s1970] ss:$4 sm:$0xff] %v1624
        %2188 = vst [vmem:[%s1972] ss:$4 sm:$0xff] %v1628
        %2189 = vst [vmem:[%s1974] ss:$4 sm:$0xff] %v1632
        %2190 = vst [vmem:[%s1976] ss:$4 sm:$0xff] %v1636
        %2191 = vst [vmem:[%s1978] ss:$4 sm:$0xff] %v1640
        %2192 = vst [vmem:[%s1980] ss:$4 sm:$0xff] %v1644
        %2193 = vst [vmem:[%s1982] ss:$4 sm:$0xff] %v1648
        %v2194 = vld.sshfl [vmem:[#allocation1] sm:$0xff pattern:$0x73625140]
        %v2195 = vld.sshfl [vmem:[#allocation1 + $0x20] sm:$0xff pattern:$0x73625140]
        %2196 = vst [vmem:[#allocation1] ss:$4 sm:$0xff] %v1652
        %2197 = vst [vmem:[%s1970] ss:$4 sm:$0xff] %v1656
        %2198 = vst [vmem:[%s1972] ss:$4 sm:$0xff] %v1660
        %2199 = vst [vmem:[%s1974] ss:$4 sm:$0xff] %v1664
        %2200 = vst [vmem:[%s1976] ss:$4 sm:$0xff] %v1668
        %2201 = vst [vmem:[%s1978] ss:$4 sm:$0xff] %v1672
        %2202 = vst [vmem:[%s1980] ss:$4 sm:$0xff] %v1676
        %2203 = vst [vmem:[%s1982] ss:$4 sm:$0xff] %v1680
        %v2204 = vld.sshfl [vmem:[#allocation1] sm:$0xff pattern:$0x73625140]
        %v2205 = vld.sshfl [vmem:[#allocation1 + $0x20] sm:$0xff pattern:$0x73625140]
        %2206 = vst [vmem:[#allocation1] ss:$4 sm:$0xff] %v1684
        %2207 = vst [vmem:[%s1970] ss:$4 sm:$0xff] %v1688
        %2208 = vst [vmem:[%s1972] ss:$4 sm:$0xff] %v1692
        %2209 = vst [vmem:[%s1974] ss:$4 sm:$0xff] %v1696
        %2210 = vst [vmem:[%s1976] ss:$4 sm:$0xff] %v1700
        %2211 = vst [vmem:[%s1978] ss:$4 sm:$0xff] %v1704
        %2212 = vst [vmem:[%s1980] ss:$4 sm:$0xff] %v1708
        %2213 = vst [vmem:[%s1982] ss:$4 sm:$0xff] %v1712
        %v2214 = vld.sshfl [vmem:[#allocation1] sm:$0xff pattern:$0x73625140]
        %v2215 = vld.sshfl [vmem:[#allocation1 + $0x20] sm:$0xff pattern:$0x73625140]
        %2216 = vst [vmem:[#allocation1] ss:$4 sm:$0xff] %v1716
        %2217 = vst [vmem:[%s1970] ss:$4 sm:$0xff] %v1720
        %2218 = vst [vmem:[%s1972] ss:$4 sm:$0xff] %v1724
        %2219 = vst [vmem:[%s1974] ss:$4 sm:$0xff] %v1728
        %2220 = vst [vmem:[%s1976] ss:$4 sm:$0xff] %v1732
        %2221 = vst [vmem:[%s1978] ss:$4 sm:$0xff] %v1736
        %2222 = vst [vmem:[%s1980] ss:$4 sm:$0xff] %v1740
        %2223 = vst [vmem:[%s1982] ss:$4 sm:$0xff] %v1744
        %v2224 = vld.sshfl [vmem:[#allocation1] sm:$0xff pattern:$0x73625140]
        %v2225 = vld.sshfl [vmem:[#allocation1 + $0x20] sm:$0xff pattern:$0x73625140]
        %2226 = vst [vmem:[#allocation1] ss:$4 sm:$0xff] %v1748
        %2227 = vst [vmem:[%s1970] ss:$4 sm:$0xff] %v1752
        %2228 = vst [vmem:[%s1972] ss:$4 sm:$0xff] %v1756
        %2229 = vst [vmem:[%s1974] ss:$4 sm:$0xff] %v1760
        %2230 = vst [vmem:[%s1976] ss:$4 sm:$0xff] %v1764
        %2231 = vst [vmem:[%s1978] ss:$4 sm:$0xff] %v1768
        %2232 = vst [vmem:[%s1980] ss:$4 sm:$0xff] %v1772
        %2233 = vst [vmem:[%s1982] ss:$4 sm:$0xff] %v1776
        %v2234 = vld.sshfl [vmem:[#allocation1] sm:$0xff pattern:$0x73625140]
        %v2235 = vld.sshfl [vmem:[#allocation1 + $0x20] sm:$0xff pattern:$0x73625140]
        %2236 = vst [vmem:[#allocation1] ss:$4 sm:$0xff] %v1780
        %2237 = vst [vmem:[%s1970] ss:$4 sm:$0xff] %v1784
        %2238 = vst [vmem:[%s1972] ss:$4 sm:$0xff] %v1788
        %2239 = vst [vmem:[%s1974] ss:$4 sm:$0xff] %v1792
        %2240 = vst [vmem:[%s1976] ss:$4 sm:$0xff] %v1796
        %2241 = vst [vmem:[%s1978] ss:$4 sm:$0xff] %v1800
        %2242 = vst [vmem:[%s1980] ss:$4 sm:$0xff] %v1804
        %2243 = vst [vmem:[%s1982] ss:$4 sm:$0xff] %v1808
        %v2244 = vld.sshfl [vmem:[#allocation1] sm:$0xff pattern:$0x73625140]
        %v2245 = vld.sshfl [vmem:[#allocation1 + $0x20] sm:$0xff pattern:$0x73625140]
        %2246 = vst [vmem:[#allocation1] ss:$4 sm:$0xff] %v1812
        %2247 = vst [vmem:[%s1970] ss:$4 sm:$0xff] %v1816
        %2248 = vst [vmem:[%s1972] ss:$4 sm:$0xff] %v1820
        %2249 = vst [vmem:[%s1974] ss:$4 sm:$0xff] %v1824
        %2250 = vst [vmem:[%s1976] ss:$4 sm:$0xff] %v1828
        %2251 = vst [vmem:[%s1978] ss:$4 sm:$0xff] %v1832
        %2252 = vst [vmem:[%s1980] ss:$4 sm:$0xff] %v1836
        %2253 = vst [vmem:[%s1982] ss:$4 sm:$0xff] %v1840
        %v2254 = vld.sshfl [vmem:[#allocation1] sm:$0xff pattern:$0x73625140]
        %v2255 = vld.sshfl [vmem:[#allocation1 + $0x20] sm:$0xff pattern:$0x73625140]
        %2256 = vst [vmem:[#allocation1] ss:$4 sm:$0xff] %v1844
        %2257 = vst [vmem:[%s1970] ss:$4 sm:$0xff] %v1848
        %2258 = vst [vmem:[%s1972] ss:$4 sm:$0xff] %v1852
        %2259 = vst [vmem:[%s1974] ss:$4 sm:$0xff] %v1856
        %2260 = vst [vmem:[%s1976] ss:$4 sm:$0xff] %v1860
        %2261 = vst [vmem:[%s1978] ss:$4 sm:$0xff] %v1864
        %2262 = vst [vmem:[%s1980] ss:$4 sm:$0xff] %v1868
        %2263 = vst [vmem:[%s1982] ss:$4 sm:$0xff] %v1872
        %v2264 = vld.sshfl [vmem:[#allocation1] sm:$0xff pattern:$0x73625140]
        %v2265 = vld.sshfl [vmem:[#allocation1 + $0x20] sm:$0xff pattern:$0x73625140]
        %2266 = vst [vmem:[#allocation1] ss:$4 sm:$0xff] %v1876
        %2267 = vst [vmem:[%s1970] ss:$4 sm:$0xff] %v1880
        %2268 = vst [vmem:[%s1972] ss:$4 sm:$0xff] %v1884
        %2269 = vst [vmem:[%s1974] ss:$4 sm:$0xff] %v1888
        %2270 = vst [vmem:[%s1976] ss:$4 sm:$0xff] %v1892
        %2271 = vst [vmem:[%s1978] ss:$4 sm:$0xff] %v1896
        %2272 = vst [vmem:[%s1980] ss:$4 sm:$0xff] %v1900
        %2273 = vst [vmem:[%s1982] ss:$4 sm:$0xff] %v1904
        %v2274 = vld.sshfl [vmem:[#allocation1] sm:$0xff pattern:$0x73625140]
        %v2275 = vld.sshfl [vmem:[#allocation1 + $0x20] sm:$0xff pattern:$0x73625140]
        %2276 = vst [vmem:[#allocation1] ss:$4 sm:$0xff] %v1908
        %2277 = vst [vmem:[%s1970] ss:$4 sm:$0xff] %v1912
        %2278 = vst [vmem:[%s1972] ss:$4 sm:$0xff] %v1916
        %2279 = vst [vmem:[%s1974] ss:$4 sm:$0xff] %v1920
        %2280 = vst [vmem:[%s1976] ss:$4 sm:$0xff] %v1924
        %2281 = vst [vmem:[%s1978] ss:$4 sm:$0xff] %v1928
        %2282 = vst [vmem:[%s1980] ss:$4 sm:$0xff] %v1932
        %2283 = vst [vmem:[%s1982] ss:$4 sm:$0xff] %v1936
        %v2284 = vld.sshfl [vmem:[#allocation1] sm:$0xff pattern:$0x73625140]
        %v2285 = vld.sshfl [vmem:[#allocation1 + $0x20] sm:$0xff pattern:$0x73625140]
        %2286 = vst [vmem:[#allocation1] ss:$4 sm:$0xff] %v1940
        %2287 = vst [vmem:[%s1970] ss:$4 sm:$0xff] %v1944
        %2288 = vst [vmem:[%s1972] ss:$4 sm:$0xff] %v1948
        %2289 = vst [vmem:[%s1974] ss:$4 sm:$0xff] %v1952
        %2290 = vst [vmem:[%s1976] ss:$4 sm:$0xff] %v1956
        %2291 = vst [vmem:[%s1978] ss:$4 sm:$0xff] %v1960
        %2292 = vst [vmem:[%s1980] ss:$4 sm:$0xff] %v1964
        %2293 = vst [vmem:[%s1982] ss:$4 sm:$0xff] %v1968
        %v2294 = vld.sshfl [vmem:[#allocation1] sm:$0xff pattern:$0x73625140]
        %v2295 = vld.sshfl [vmem:[#allocation1 + $0x20] sm:$0xff pattern:$0x73625140]
        %2296 = vset.pattern.permute.xlu0 0
        %2297 = vperm.xlu0 %2296, %v1984
        %v2298 = vpop.permute.xlu0 %2297
        %2299 = vset.pattern.permute.xlu0 0
        %2300 = vperm.xlu0 %2299, %v1985
        %v2301 = vpop.permute.xlu0 %2300
        %2302 = vset.pattern.permute.xlu0 0
        %2303 = vperm.xlu0 %2302, %v1994
        %v2304 = vpop.permute.xlu0 %2303
        %2305 = vset.pattern.permute.xlu0 0
        %2306 = vperm.xlu0 %2305, %v1995
        %v2307 = vpop.permute.xlu0 %2306
        %2308 = vset.pattern.permute.xlu0 0
        %2309 = vperm.xlu0 %2308, %v2004
        %v2310 = vpop.permute.xlu0 %2309
        %2311 = vset.pattern.permute.xlu0 0
        %2312 = vperm.xlu0 %2311, %v2005
        %v2313 = vpop.permute.xlu0 %2312
        %2314 = vset.pattern.permute.xlu0 0
        %2315 = vperm.xlu0 %2314, %v2014
        %v2316 = vpop.permute.xlu0 %2315
        %2317 = vset.pattern.permute.xlu0 0
        %2318 = vperm.xlu0 %2317, %v2015
        %v2319 = vpop.permute.xlu0 %2318
        %2320 = vset.pattern.permute.xlu0 0
        %2321 = vperm.xlu0 %2320, %v2024
        %v2322 = vpop.permute.xlu0 %2321
        %2323 = vset.pattern.permute.xlu0 0
        %2324 = vperm.xlu0 %2323, %v2025
        %v2325 = vpop.permute.xlu0 %2324
        %2326 = vset.pattern.permute.xlu0 0
        %2327 = vperm.xlu0 %2326, %v2034
        %v2328 = vpop.permute.xlu0 %2327
        %2329 = vset.pattern.permute.xlu0 0
        %2330 = vperm.xlu0 %2329, %v2035
        %v2331 = vpop.permute.xlu0 %2330
        %2332 = vset.pattern.permute.xlu0 0
        %2333 = vperm.xlu0 %2332, %v2044
        %v2334 = vpop.permute.xlu0 %2333
        %2335 = vset.pattern.permute.xlu0 0
        %2336 = vperm.xlu0 %2335, %v2045
        %v2337 = vpop.permute.xlu0 %2336
        %2338 = vset.pattern.permute.xlu0 0
        %2339 = vperm.xlu0 %2338, %v2054
        %v2340 = vpop.permute.xlu0 %2339
        %2341 = vset.pattern.permute.xlu0 0
        %2342 = vperm.xlu0 %2341, %v2055
        %v2343 = vpop.permute.xlu0 %2342
        %2344 = vset.pattern.permute.xlu0 0
        %2345 = vperm.xlu0 %2344, %v2064
        %v2346 = vpop.permute.xlu0 %2345
        %2347 = vset.pattern.permute.xlu0 0
        %2348 = vperm.xlu0 %2347, %v2065
        %v2349 = vpop.permute.xlu0 %2348
        %2350 = vset.pattern.permute.xlu0 0
        %2351 = vperm.xlu0 %2350, %v2074
        %v2352 = vpop.permute.xlu0 %2351
        %2353 = vset.pattern.permute.xlu0 0
        %2354 = vperm.xlu0 %2353, %v2075
        %v2355 = vpop.permute.xlu0 %2354
        %2356 = vset.pattern.permute.xlu0 0
        %2357 = vperm.xlu0 %2356, %v2084
        %v2358 = vpop.permute.xlu0 %2357
        %2359 = vset.pattern.permute.xlu0 0
        %2360 = vperm.xlu0 %2359, %v2085
        %v2361 = vpop.permute.xlu0 %2360
        %2362 = vset.pattern.permute.xlu0 0
        %2363 = vperm.xlu0 %2362, %v2094
        %v2364 = vpop.permute.xlu0 %2363
        %2365 = vset.pattern.permute.xlu0 0
        %2366 = vperm.xlu0 %2365, %v2095
        %v2367 = vpop.permute.xlu0 %2366
        %2368 = vset.pattern.permute.xlu0 0
        %2369 = vperm.xlu0 %2368, %v2104
        %v2370 = vpop.permute.xlu0 %2369
        %2371 = vset.pattern.permute.xlu0 0
        %2372 = vperm.xlu0 %2371, %v2105
        %v2373 = vpop.permute.xlu0 %2372
        %2374 = vset.pattern.permute.xlu0 0
        %2375 = vperm.xlu0 %2374, %v2114
        %v2376 = vpop.permute.xlu0 %2375
        %2377 = vset.pattern.permute.xlu0 0
        %2378 = vperm.xlu0 %2377, %v2115
        %v2379 = vpop.permute.xlu0 %2378
        %2380 = vset.pattern.permute.xlu0 0
        %2381 = vperm.xlu0 %2380, %v2124
        %v2382 = vpop.permute.xlu0 %2381
        %2383 = vset.pattern.permute.xlu0 0
        %2384 = vperm.xlu0 %2383, %v2125
        %v2385 = vpop.permute.xlu0 %2384
        %2386 = vset.pattern.permute.xlu0 0
        %2387 = vperm.xlu0 %2386, %v2134
        %v2388 = vpop.permute.xlu0 %2387
        %2389 = vset.pattern.permute.xlu0 0
        %2390 = vperm.xlu0 %2389, %v2135
        %v2391 = vpop.permute.xlu0 %2390
        %2392 = vset.pattern.permute.xlu0 0
        %2393 = vperm.xlu0 %2392, %v2144
        %v2394 = vpop.permute.xlu0 %2393
        %2395 = vset.pattern.permute.xlu0 0
        %2396 = vperm.xlu0 %2395, %v2145
        %v2397 = vpop.permute.xlu0 %2396
        %2398 = vset.pattern.permute.xlu0 0
        %2399 = vperm.xlu0 %2398, %v2154
        %v2400 = vpop.permute.xlu0 %2399
        %2401 = vset.pattern.permute.xlu0 0
        %2402 = vperm.xlu0 %2401, %v2155
        %v2403 = vpop.permute.xlu0 %2402
        %2404 = vset.pattern.permute.xlu0 0
        %2405 = vperm.xlu0 %2404, %v2164
        %v2406 = vpop.permute.xlu0 %2405
        %2407 = vset.pattern.permute.xlu0 0
        %2408 = vperm.xlu0 %2407, %v2165
        %v2409 = vpop.permute.xlu0 %2408
        %2410 = vset.pattern.permute.xlu0 0
        %2411 = vperm.xlu0 %2410, %v2174
        %v2412 = vpop.permute.xlu0 %2411
        %2413 = vset.pattern.permute.xlu0 0
        %2414 = vperm.xlu0 %2413, %v2175
        %v2415 = vpop.permute.xlu0 %2414
        %2416 = vset.pattern.permute.xlu0 0
        %2417 = vperm.xlu0 %2416, %v2184
        %v2418 = vpop.permute.xlu0 %2417
        %2419 = vset.pattern.permute.xlu0 0
        %2420 = vperm.xlu0 %2419, %v2185
        %v2421 = vpop.permute.xlu0 %2420
        %2422 = vset.pattern.permute.xlu0 0
        %2423 = vperm.xlu0 %2422, %v2194
        %v2424 = vpop.permute.xlu0 %2423
        %2425 = vset.pattern.permute.xlu0 0
        %2426 = vperm.xlu0 %2425, %v2195
        %v2427 = vpop.permute.xlu0 %2426
        %2428 = vset.pattern.permute.xlu0 0
        %2429 = vperm.xlu0 %2428, %v2204
        %v2430 = vpop.permute.xlu0 %2429
        %2431 = vset.pattern.permute.xlu0 0
        %2432 = vperm.xlu0 %2431, %v2205
        %v2433 = vpop.permute.xlu0 %2432
        %2434 = vset.pattern.permute.xlu0 0
        %2435 = vperm.xlu0 %2434, %v2214
        %v2436 = vpop.permute.xlu0 %2435
        %2437 = vset.pattern.permute.xlu0 0
        %2438 = vperm.xlu0 %2437, %v2215
        %v2439 = vpop.permute.xlu0 %2438
        %2440 = vset.pattern.permute.xlu0 0
        %2441 = vperm.xlu0 %2440, %v2224
        %v2442 = vpop.permute.xlu0 %2441
        %2443 = vset.pattern.permute.xlu0 0
        %2444 = vperm.xlu0 %2443, %v2225
        %v2445 = vpop.permute.xlu0 %2444
        %2446 = vset.pattern.permute.xlu0 0
        %2447 = vperm.xlu0 %2446, %v2234
        %v2448 = vpop.permute.xlu0 %2447
        %2449 = vset.pattern.permute.xlu0 0
        %2450 = vperm.xlu0 %2449, %v2235
        %v2451 = vpop.permute.xlu0 %2450
        %2452 = vset.pattern.permute.xlu0 0
        %2453 = vperm.xlu0 %2452, %v2244
        %v2454 = vpop.permute.xlu0 %2453
        %2455 = vset.pattern.permute.xlu0 0
        %2456 = vperm.xlu0 %2455, %v2245
        %v2457 = vpop.permute.xlu0 %2456
        %2458 = vset.pattern.permute.xlu0 0
        %2459 = vperm.xlu0 %2458, %v2254
        %v2460 = vpop.permute.xlu0 %2459
        %2461 = vset.pattern.permute.xlu0 0
        %2462 = vperm.xlu0 %2461, %v2255
        %v2463 = vpop.permute.xlu0 %2462
        %2464 = vset.pattern.permute.xlu0 0
        %2465 = vperm.xlu0 %2464, %v2264
        %v2466 = vpop.permute.xlu0 %2465
        %2467 = vset.pattern.permute.xlu0 0
        %2468 = vperm.xlu0 %2467, %v2265
        %v2469 = vpop.permute.xlu0 %2468
        %2470 = vset.pattern.permute.xlu0 0
        %2471 = vperm.xlu0 %2470, %v2274
        %v2472 = vpop.permute.xlu0 %2471
        %2473 = vset.pattern.permute.xlu0 0
        %2474 = vperm.xlu0 %2473, %v2275
        %v2475 = vpop.permute.xlu0 %2474
        %2476 = vset.pattern.permute.xlu0 0
        %2477 = vperm.xlu0 %2476, %v2284
        %v2478 = vpop.permute.xlu0 %2477
        %2479 = vset.pattern.permute.xlu0 0
        %2480 = vperm.xlu0 %2479, %v2285
        %v2481 = vpop.permute.xlu0 %2480
        %2482 = vset.pattern.permute.xlu0 0
        %2483 = vperm.xlu0 %2482, %v2294
        %v2484 = vpop.permute.xlu0 %2483
        %2485 = vset.pattern.permute.xlu0 0
        %2486 = vperm.xlu0 %2485, %v2295
        %v2487 = vpop.permute.xlu0 %2486
        %v2488 = vlaneseq
        %v2489 = vand.u32 %v2488, 127
        %v2490 = vperm.slane %v2298, %v2489
        %v2491 = vadd.s32 %v2489, 4294967288
        %v2492 = vperm.slane %v2301, %v2491
        %vm2493 = vcmask 130112
        %v2494 = vsel %vm2493, %v2492, %v2490
        %v2495 = vadd.s32 %v2489, 4294967280
        %v2496 = vperm.slane %v2304, %v2495
        %vm2497 = vcmask 195712
        %v2498 = vsel %vm2497, %v2496, %v2494
        %v2499 = vadd.s32 %v2489, 4294967272
        %v2500 = vperm.slane %v2307, %v2499
        %vm2501 = vcmask 261312
        %v2502 = vsel %vm2501, %v2500, %v2498
        %v2503 = vadd.s32 %v2489, 4294967264
        %v2504 = vperm.slane %v2310, %v2503
        %vm2505 = vcmask 326912
        %v2506 = vsel %vm2505, %v2504, %v2502
        %v2507 = vadd.s32 %v2489, 4294967256
        %v2508 = vperm.slane %v2313, %v2507
        %vm2509 = vcmask 392512
        %v2510 = vsel %vm2509, %v2508, %v2506
        %v2511 = vadd.s32 %v2489, 4294967248
        %v2512 = vperm.slane %v2316, %v2511
        %vm2513 = vcmask 458112
        %v2514 = vsel %vm2513, %v2512, %v2510
        %v2515 = vadd.s32 %v2489, 4294967240
        %v2516 = vperm.slane %v2319, %v2515
        %vm2517 = vcmask 523712
        %v2518 = vsel %vm2517, %v2516, %v2514
        %v2519 = vadd.s32 %v2489, 4294967232
        %v2520 = vperm.slane %v2322, %v2519
        %vm2521 = vcmask 589312
        %v2522 = vsel %vm2521, %v2520, %v2518
        %v2523 = vadd.s32 %v2489, 4294967224
        %v2524 = vperm.slane %v2325, %v2523
        %vm2525 = vcmask 654912
        %v2526 = vsel %vm2525, %v2524, %v2522
        %v2527 = vadd.s32 %v2489, 4294967216
        %v2528 = vperm.slane %v2328, %v2527
        %vm2529 = vcmask 720512
        %v2530 = vsel %vm2529, %v2528, %v2526
        %v2531 = vadd.s32 %v2489, 4294967208
        %v2532 = vperm.slane %v2331, %v2531
        %vm2533 = vcmask 786112
        %v2534 = vsel %vm2533, %v2532, %v2530
        %v2535 = vadd.s32 %v2489, 4294967200
        %v2536 = vperm.slane %v2334, %v2535
        %vm2537 = vcmask 851712
        %v2538 = vsel %vm2537, %v2536, %v2534
        %v2539 = vadd.s32 %v2489, 4294967192
        %v2540 = vperm.slane %v2337, %v2539
        %vm2541 = vcmask 917312
        %v2542 = vsel %vm2541, %v2540, %v2538
        %v2543 = vadd.s32 %v2489, 4294967184
        %v2544 = vperm.slane %v2340, %v2543
        %vm2545 = vcmask 982912
        %v2546 = vsel %vm2545, %v2544, %v2542
        %v2547 = vadd.s32 %v2489, 4294967176
        %v2548 = vperm.slane %v2343, %v2547
        %vm2549 = vcmask 1048512
        %v2550 = vsel %vm2549, %v2548, %v2546
        %v2551 = vperm.slane %v2346, %v2489
        %v2552 = vperm.slane %v2349, %v2491
        %v2553 = vsel %vm2493, %v2552, %v2551
        %v2554 = vperm.slane %v2352, %v2495
        %v2555 = vsel %vm2497, %v2554, %v2553
        %v2556 = vperm.slane %v2355, %v2499
        %v2557 = vsel %vm2501, %v2556, %v2555
        %v2558 = vperm.slane %v2358, %v2503
        %v2559 = vsel %vm2505, %v2558, %v2557
        %v2560 = vperm.slane %v2361, %v2507
        %v2561 = vsel %vm2509, %v2560, %v2559
        %v2562 = vperm.slane %v2364, %v2511
        %v2563 = vsel %vm2513, %v2562, %v2561
        %v2564 = vperm.slane %v2367, %v2515
        %v2565 = vsel %vm2517, %v2564, %v2563
        %v2566 = vperm.slane %v2370, %v2519
        %v2567 = vsel %vm2521, %v2566, %v2565
        %v2568 = vperm.slane %v2373, %v2523
        %v2569 = vsel %vm2525, %v2568, %v2567
        %v2570 = vperm.slane %v2376, %v2527
        %v2571 = vsel %vm2529, %v2570, %v2569
        %v2572 = vperm.slane %v2379, %v2531
        %v2573 = vsel %vm2533, %v2572, %v2571
        %v2574 = vperm.slane %v2382, %v2535
        %v2575 = vsel %vm2537, %v2574, %v2573
        %v2576 = vperm.slane %v2385, %v2539
        %v2577 = vsel %vm2541, %v2576, %v2575
        %v2578 = vperm.slane %v2388, %v2543
        %v2579 = vsel %vm2545, %v2578, %v2577
        %v2580 = vperm.slane %v2391, %v2547
        %v2581 = vsel %vm2549, %v2580, %v2579
        %v2582 = vperm.slane %v2394, %v2489
        %v2583 = vperm.slane %v2397, %v2491
        %v2584 = vsel %vm2493, %v2583, %v2582
        %v2585 = vperm.slane %v2400, %v2495
        %v2586 = vsel %vm2497, %v2585, %v2584
        %v2587 = vperm.slane %v2403, %v2499
        %v2588 = vsel %vm2501, %v2587, %v2586
        %v2589 = vperm.slane %v2406, %v2503
        %v2590 = vsel %vm2505, %v2589, %v2588
        %v2591 = vperm.slane %v2409, %v2507
        %v2592 = vsel %vm2509, %v2591, %v2590
        %v2593 = vperm.slane %v2412, %v2511
        %v2594 = vsel %vm2513, %v2593, %v2592
        %v2595 = vperm.slane %v2415, %v2515
        %v2596 = vsel %vm2517, %v2595, %v2594
        %v2597 = vperm.slane %v2418, %v2519
        %v2598 = vsel %vm2521, %v2597, %v2596
        %v2599 = vperm.slane %v2421, %v2523
        %v2600 = vsel %vm2525, %v2599, %v2598
        %v2601 = vperm.slane %v2424, %v2527
        %v2602 = vsel %vm2529, %v2601, %v2600
        %v2603 = vperm.slane %v2427, %v2531
        %v2604 = vsel %vm2533, %v2603, %v2602
        %v2605 = vperm.slane %v2430, %v2535
        %v2606 = vsel %vm2537, %v2605, %v2604
        %v2607 = vperm.slane %v2433, %v2539
        %v2608 = vsel %vm2541, %v2607, %v2606
        %v2609 = vperm.slane %v2436, %v2543
        %v2610 = vsel %vm2545, %v2609, %v2608
        %v2611 = vperm.slane %v2439, %v2547
        %v2612 = vsel %vm2549, %v2611, %v2610
        %v2613 = vperm.slane %v2442, %v2489
        %v2614 = vperm.slane %v2445, %v2491
        %v2615 = vsel %vm2493, %v2614, %v2613
        %v2616 = vperm.slane %v2448, %v2495
        %v2617 = vsel %vm2497, %v2616, %v2615
        %v2618 = vperm.slane %v2451, %v2499
        %v2619 = vsel %vm2501, %v2618, %v2617
        %v2620 = vperm.slane %v2454, %v2503
        %v2621 = vsel %vm2505, %v2620, %v2619
        %v2622 = vperm.slane %v2457, %v2507
        %v2623 = vsel %vm2509, %v2622, %v2621
        %v2624 = vperm.slane %v2460, %v2511
        %v2625 = vsel %vm2513, %v2624, %v2623
        %v2626 = vperm.slane %v2463, %v2515
        %v2627 = vsel %vm2517, %v2626, %v2625
        %v2628 = vperm.slane %v2466, %v2519
        %v2629 = vsel %vm2521, %v2628, %v2627
        %v2630 = vperm.slane %v2469, %v2523
        %v2631 = vsel %vm2525, %v2630, %v2629
        %v2632 = vperm.slane %v2472, %v2527
        %v2633 = vsel %vm2529, %v2632, %v2631
        %v2634 = vperm.slane %v2475, %v2531
        %v2635 = vsel %vm2533, %v2634, %v2633
        %v2636 = vperm.slane %v2478, %v2535
        %v2637 = vsel %vm2537, %v2636, %v2635
        %v2638 = vperm.slane %v2481, %v2539
        %v2639 = vsel %vm2541, %v2638, %v2637
        %v2640 = vperm.slane %v2484, %v2543
        %v2641 = vsel %vm2545, %v2640, %v2639
        %v2642 = vperm.slane %v2487, %v2547
        %v2643 = vsel %vm2549, %v2642, %v2641
        %vm2644 = vcmask 1041409
        %v2645 = vsel %vm2644, %v2612, %v2550
        %v2646 = vsel %vm2644, %v2643, %v2581
        %v2647 = vrot.slane %v2646, 6
        %v2648 = vsel %vm503, %v2645, %v2647
        %v2650 = vadd.f32 %v752, %v2648
        %2651 = vst [vmem:[#allocation2] sm:$0xf] %v2650
        %p2652 = scmp.eq.s32.totalorder %s25, 1
        // Predicated region
        $region91: #{tpu_custom_call.1} parent=73 // pred_check
          %p2653 = pneg %p2652
        $region92: #{tpu_custom_call.1} parent=73 // pred_check_branch
          %2655 = sbr.rel (%p2653) target = $region94
        $region93: #{tpu_custom_call.1} parent=73 // pred_region
          %v2656 = vld [vmem:[#allocation2] sm:$0xf]
          %v2657 = vmul.f32 %v2656, 0.00390625
          %2659 = vst [vmem:[#allocation1] ss:$4 sm:$0xff] %v2657
          %v2660 = vld.sshfl [vmem:[#allocation1] sm:$0xff pattern:$0x73625140]
          %v2661 = vld.sshfl [vmem:[#allocation1 + $0x8] sm:$0xff pattern:$0x73625140]
          %v2664 = vpack.c.bf16 %v2661, %v2660
          %v2666 = vunpack.c.h.b16 %v2664
          %v2667 = vpack.c.b16 %v2666, %v2666
          %v2668 = vrot.slane %v2667, 7
          %vm2669 = vcmask 1040384
          %v2672 = vsel %vm2669, %v2664, %v2668
          %v2674 = vld [vmem:[#allocation4] sm:$0xff]
          %v2675 = vld [vmem:[#allocation4 + $0x8] sm:$0xff]
          %v2676 = vld [vmem:[#allocation4 + $0x10] sm:$0xff]
          %v2677 = vld [vmem:[#allocation4 + $0x18] sm:$0xff]
          %v2678 = vld [vmem:[#allocation4 + $0x20] sm:$0xff]
          %v2679 = vld [vmem:[#allocation4 + $0x28] sm:$0xff]
          %v2680 = vld [vmem:[#allocation4 + $0x30] sm:$0xff]
          %v2681 = vld [vmem:[#allocation4 + $0x38] sm:$0xff]
          %v2682 = vld [vmem:[#allocation4 + $0x40] sm:$0xff]
          %v2683 = vld [vmem:[#allocation4 + $0x48] sm:$0xff]
          %v2684 = vld [vmem:[#allocation4 + $0x50] sm:$0xff]
          %v2685 = vld [vmem:[#allocation4 + $0x58] sm:$0xff]
          %v2686 = vld [vmem:[#allocation4 + $0x60] sm:$0xff]
          %v2687 = vld [vmem:[#allocation4 + $0x68] sm:$0xff]
          %v2688 = vld [vmem:[#allocation4 + $0x70] sm:$0xff]
          %v2689 = vld [vmem:[#allocation4 + $0x78] sm:$0xff]
          %v2690 = vld [vmem:[#allocation4 + $0x80] sm:$0xff]
          %v2691 = vld [vmem:[#allocation4 + $0x88] sm:$0xff]
          %v2692 = vld [vmem:[#allocation4 + $0x90] sm:$0xff]
          %v2693 = vld [vmem:[#allocation4 + $0x98] sm:$0xff]
          %v2694 = vld [vmem:[#allocation4 + $0xa0] sm:$0xff]
          %v2695 = vld [vmem:[#allocation4 + $0xa8] sm:$0xff]
          %v2696 = vld [vmem:[#allocation4 + $0xb0] sm:$0xff]
          %v2697 = vld [vmem:[#allocation4 + $0xb8] sm:$0xff]
          %v2698 = vld [vmem:[#allocation4 + $0xc0] sm:$0xff]
          %v2699 = vld [vmem:[#allocation4 + $0xc8] sm:$0xff]
          %v2700 = vld [vmem:[#allocation4 + $0xd0] sm:$0xff]
          %v2701 = vld [vmem:[#allocation4 + $0xd8] sm:$0xff]
          %v2702 = vld [vmem:[#allocation4 + $0xe0] sm:$0xff]
          %v2703 = vld [vmem:[#allocation4 + $0xe8] sm:$0xff]
          %v2704 = vld [vmem:[#allocation4 + $0xf0] sm:$0xff]
          %v2705 = vld [vmem:[#allocation4 + $0xf8] sm:$0xff]
          %v2706 = vld [vmem:[%s3] sm:$0xf]
          %v2708 = vperm.slane %v2706, 0
          %v2709 = vperm.slane %v2706, 1
          %v2710 = vperm.slane %v2706, 2
          %v2711 = vperm.slane %v2706, 3
          %v2748 = vunpack.c.l.b16 %v2674
          %v2749 = vunpack.c.h.b16 %v2674
          %v2750 = vunpack.c.l.b16 %v2675
          %v2751 = vunpack.c.h.b16 %v2675
          %v2752 = vunpack.c.l.b16 %v2676
          %v2753 = vunpack.c.h.b16 %v2676
          %v2754 = vunpack.c.l.b16 %v2677
          %v2755 = vunpack.c.h.b16 %v2677
          %v2756 = vunpack.c.l.b16 %v2678
          %v2757 = vunpack.c.h.b16 %v2678
          %v2758 = vunpack.c.l.b16 %v2679
          %v2759 = vunpack.c.h.b16 %v2679
          %v2760 = vunpack.c.l.b16 %v2680
          %v2761 = vunpack.c.h.b16 %v2680
          %v2762 = vunpack.c.l.b16 %v2681
          %v2763 = vunpack.c.h.b16 %v2681
          %v2764 = vunpack.c.l.b16 %v2682
          %v2765 = vunpack.c.h.b16 %v2682
          %v2766 = vunpack.c.l.b16 %v2683
          %v2767 = vunpack.c.h.b16 %v2683
          %v2768 = vunpack.c.l.b16 %v2684
          %v2769 = vunpack.c.h.b16 %v2684
          %v2770 = vunpack.c.l.b16 %v2685
          %v2771 = vunpack.c.h.b16 %v2685
          %v2772 = vunpack.c.l.b16 %v2686
          %v2773 = vunpack.c.h.b16 %v2686
          %v2774 = vunpack.c.l.b16 %v2687
          %v2775 = vunpack.c.h.b16 %v2687
          %v2776 = vunpack.c.l.b16 %v2688
          %v2777 = vunpack.c.h.b16 %v2688
          %v2778 = vunpack.c.l.b16 %v2689
          %v2779 = vunpack.c.h.b16 %v2689
          %v2780 = vunpack.c.l.b16 %v2690
          %v2781 = vunpack.c.h.b16 %v2690
          %v2782 = vunpack.c.l.b16 %v2691
          %v2783 = vunpack.c.h.b16 %v2691
          %v2784 = vunpack.c.l.b16 %v2692
          %v2785 = vunpack.c.h.b16 %v2692
          %v2786 = vunpack.c.l.b16 %v2693
          %v2787 = vunpack.c.h.b16 %v2693
          %v2788 = vunpack.c.l.b16 %v2694
          %v2789 = vunpack.c.h.b16 %v2694
          %v2790 = vunpack.c.l.b16 %v2695
          %v2791 = vunpack.c.h.b16 %v2695
          %v2792 = vunpack.c.l.b16 %v2696
          %v2793 = vunpack.c.h.b16 %v2696
          %v2794 = vunpack.c.l.b16 %v2697
          %v2795 = vunpack.c.h.b16 %v2697
          %v2796 = vunpack.c.l.b16 %v2698
          %v2797 = vunpack.c.h.b16 %v2698
          %v2798 = vunpack.c.l.b16 %v2699
          %v2799 = vunpack.c.h.b16 %v2699
          %v2800 = vunpack.c.l.b16 %v2700
          %v2801 = vunpack.c.h.b16 %v2700
          %v2802 = vunpack.c.l.b16 %v2701
          %v2803 = vunpack.c.h.b16 %v2701
          %v2804 = vunpack.c.l.b16 %v2702
          %v2805 = vunpack.c.h.b16 %v2702
          %v2806 = vunpack.c.l.b16 %v2703
          %v2807 = vunpack.c.h.b16 %v2703
          %v2808 = vunpack.c.l.b16 %v2704
          %v2809 = vunpack.c.h.b16 %v2704
          %v2810 = vunpack.c.l.b16 %v2705
          %v2811 = vunpack.c.h.b16 %v2705
          %v2812 = vpack.c.b16 %v2752, %v2748
          %v2813 = vpack.c.b16 %v2753, %v2749
          %v2814 = vpack.c.b16 %v2754, %v2750
          %v2815 = vpack.c.b16 %v2755, %v2751
          %v2816 = vpack.c.b16 %v2760, %v2756
          %v2817 = vpack.c.b16 %v2761, %v2757
          %v2818 = vpack.c.b16 %v2762, %v2758
          %v2819 = vpack.c.b16 %v2763, %v2759
          %v2820 = vpack.c.b16 %v2768, %v2764
          %v2821 = vpack.c.b16 %v2769, %v2765
          %v2822 = vpack.c.b16 %v2770, %v2766
          %v2823 = vpack.c.b16 %v2771, %v2767
          %v2824 = vpack.c.b16 %v2776, %v2772
          %v2825 = vpack.c.b16 %v2777, %v2773
          %v2826 = vpack.c.b16 %v2778, %v2774
          %v2827 = vpack.c.b16 %v2779, %v2775
          %v2828 = vpack.c.b16 %v2784, %v2780
          %v2829 = vpack.c.b16 %v2785, %v2781
          %v2830 = vpack.c.b16 %v2786, %v2782
          %v2831 = vpack.c.b16 %v2787, %v2783
          %v2832 = vpack.c.b16 %v2792, %v2788
          %v2833 = vpack.c.b16 %v2793, %v2789
          %v2834 = vpack.c.b16 %v2794, %v2790
          %v2835 = vpack.c.b16 %v2795, %v2791
          %v2836 = vpack.c.b16 %v2800, %v2796
          %v2837 = vpack.c.b16 %v2801, %v2797
          %v2838 = vpack.c.b16 %v2802, %v2798
          %v2839 = vpack.c.b16 %v2803, %v2799
          %v2840 = vpack.c.b16 %v2808, %v2804
          %v2841 = vpack.c.b16 %v2809, %v2805
          %v2842 = vpack.c.b16 %v2810, %v2806
          %v2843 = vpack.c.b16 %v2811, %v2807
          %2876 = vmatpush.bf16.msra.mxu0 %v2840
          %2877 = vmatpush.bf16.msra.mxu0 %v2836
          %2878 = vmatpush.bf16.msra.mxu0 %v2832
          %2879 = vmatpush.bf16.msra.mxu0 %v2828
          %2880 = vmatpush.bf16.msra.mxu0 %v2824
          %2881 = vmatpush.bf16.msra.mxu0 %v2820
          %2882 = vmatpush.bf16.msra.mxu0 %v2816
          %2883 = vmatpush.bf16.msra.mxu0 %v2812
          %2884 = vmatmul.bf16.gmra.mxu0 %v2672
          %v2885 = vpop.f32.mrf.mxu0
          %v2886 = vadd.f32 %v2708, %v2885
          %v2887 = vpop.f32.mrf.mxu0
          %2888 = vdwg.mxu0
          %2889 = vmatpush.bf16.msra.mxu0 %v2841
          %2890 = vmatpush.bf16.msra.mxu0 %v2837
          %2891 = vmatpush.bf16.msra.mxu0 %v2833
          %2892 = vmatpush.bf16.msra.mxu0 %v2829
          %2893 = vmatpush.bf16.msra.mxu0 %v2825
          %2894 = vmatpush.bf16.msra.mxu0 %v2821
          %2895 = vmatpush.bf16.msra.mxu0 %v2817
          %2896 = vmatpush.bf16.msra.mxu0 %v2813
          %2897 = vmatmul.bf16.gmra.mxu0 %v2672
          %v2898 = vpop.f32.mrf.mxu0
          %v2899 = vadd.f32 %v2709, %v2898
          %v2900 = vpop.f32.mrf.mxu0
          %2901 = vdwg.mxu0
          %2902 = vmatpush.bf16.msra.mxu0 %v2842
          %2903 = vmatpush.bf16.msra.mxu0 %v2838
          %2904 = vmatpush.bf16.msra.mxu0 %v2834
          %2905 = vmatpush.bf16.msra.mxu0 %v2830
          %2906 = vmatpush.bf16.msra.mxu0 %v2826
          %2907 = vmatpush.bf16.msra.mxu0 %v2822
          %2908 = vmatpush.bf16.msra.mxu0 %v2818
          %2909 = vmatpush.bf16.msra.mxu0 %v2814
          %2910 = vmatmul.bf16.gmra.mxu0 %v2672
          %v2911 = vpop.f32.mrf.mxu0
          %v2912 = vadd.f32 %v2710, %v2911
          %v2913 = vpop.f32.mrf.mxu0
          %2914 = vdwg.mxu0
          %2915 = vmatpush.bf16.msra.mxu0 %v2843
          %2916 = vmatpush.bf16.msra.mxu0 %v2839
          %2917 = vmatpush.bf16.msra.mxu0 %v2835
          %2918 = vmatpush.bf16.msra.mxu0 %v2831
          %2919 = vmatpush.bf16.msra.mxu0 %v2827
          %2920 = vmatpush.bf16.msra.mxu0 %v2823
          %2921 = vmatpush.bf16.msra.mxu0 %v2819
          %2922 = vmatpush.bf16.msra.mxu0 %v2815
          %2923 = vmatmul.bf16.gmra.mxu0 %v2672
          %v2924 = vpop.f32.mrf.mxu0
          %v2925 = vadd.f32 %v2711, %v2924
          %v2926 = vpop.f32.mrf.mxu0
          %2927 = vdwg.mxu0
          %v2928 = vmax.f32 %v2886, 0.0
          %v2929 = vmax.f32 %v2899, 0.0
          %v2930 = vmax.f32 %v2912, 0.0
          %v2931 = vmax.f32 %v2925, 0.0
          %v2932 = vpack.c.bf16 %v2928, %v2928
          %v2933 = vpack.c.bf16 %v2929, %v2929
          %v2934 = vpack.c.bf16 %v2930, %v2930
          %v2935 = vpack.c.bf16 %v2931, %v2931
          %v2936 = vld [vmem:[#allocation7] sm:$0xf]
          %v2937 = vld [vmem:[#allocation7 + $0x4] sm:$0xf]
          %v2938 = vld [vmem:[#allocation7 + $0x8] sm:$0xf]
          %v2939 = vld [vmem:[#allocation7 + $0xc] sm:$0xf]
          %v2940 = vld [vmem:[#allocation7 + $0x10] sm:$0xf]
          %v2941 = vld [vmem:[#allocation7 + $0x14] sm:$0xf]
          %v2942 = vld [vmem:[#allocation7 + $0x18] sm:$0xf]
          %v2943 = vld [vmem:[#allocation7 + $0x1c] sm:$0xf]
          %v2944 = vld [vmem:[#allocation7 + $0x20] sm:$0xf]
          %v2945 = vld [vmem:[#allocation7 + $0x24] sm:$0xf]
          %v2946 = vld [vmem:[#allocation7 + $0x28] sm:$0xf]
          %v2947 = vld [vmem:[#allocation7 + $0x2c] sm:$0xf]
          %v2948 = vld [vmem:[#allocation7 + $0x30] sm:$0xf]
          %v2949 = vld [vmem:[#allocation7 + $0x34] sm:$0xf]
          %v2950 = vld [vmem:[#allocation7 + $0x38] sm:$0xf]
          %v2951 = vld [vmem:[#allocation7 + $0x3c] sm:$0xf]
          %v2952 = vld [vmem:[#allocation7 + $0x40] sm:$0xf]
          %v2953 = vld [vmem:[#allocation7 + $0x44] sm:$0xf]
          %v2954 = vld [vmem:[#allocation7 + $0x48] sm:$0xf]
          %v2955 = vld [vmem:[#allocation7 + $0x4c] sm:$0xf]
          %v2956 = vld [vmem:[#allocation7 + $0x50] sm:$0xf]
          %v2957 = vld [vmem:[#allocation7 + $0x54] sm:$0xf]
          %v2958 = vld [vmem:[#allocation7 + $0x58] sm:$0xf]
          %v2959 = vld [vmem:[#allocation7 + $0x5c] sm:$0xf]
          %v2960 = vld [vmem:[#allocation7 + $0x60] sm:$0xf]
          %v2961 = vld [vmem:[#allocation7 + $0x64] sm:$0xf]
          %v2962 = vld [vmem:[#allocation7 + $0x68] sm:$0xf]
          %v2963 = vld [vmem:[#allocation7 + $0x6c] sm:$0xf]
          %v2964 = vld [vmem:[#allocation7 + $0x70] sm:$0xf]
          %v2965 = vld [vmem:[#allocation7 + $0x74] sm:$0xf]
          %v2966 = vld [vmem:[#allocation7 + $0x78] sm:$0xf]
          %v2967 = vld [vmem:[#allocation7 + $0x7c] sm:$0xf]
          %v2968 = vld [vmem:[#allocation7 + $0x80] sm:$0xf]
          %v2969 = vld [vmem:[#allocation7 + $0x84] sm:$0xf]
          %v2970 = vld [vmem:[#allocation7 + $0x88] sm:$0xf]
          %v2971 = vld [vmem:[#allocation7 + $0x8c] sm:$0xf]
          %v2972 = vld [vmem:[#allocation7 + $0x90] sm:$0xf]
          %v2973 = vld [vmem:[#allocation7 + $0x94] sm:$0xf]
          %v2974 = vld [vmem:[#allocation7 + $0x98] sm:$0xf]
          %v2975 = vld [vmem:[#allocation7 + $0x9c] sm:$0xf]
          %v2976 = vld [vmem:[#allocation7 + $0xa0] sm:$0xf]
          %v2977 = vld [vmem:[#allocation7 + $0xa4] sm:$0xf]
          %v2978 = vld [vmem:[#allocation7 + $0xa8] sm:$0xf]
          %v2979 = vld [vmem:[#allocation7 + $0xac] sm:$0xf]
          %v2980 = vld [vmem:[#allocation7 + $0xb0] sm:$0xf]
          %v2981 = vld [vmem:[#allocation7 + $0xb4] sm:$0xf]
          %v2982 = vld [vmem:[#allocation7 + $0xb8] sm:$0xf]
          %v2983 = vld [vmem:[#allocation7 + $0xbc] sm:$0xf]
          %v2984 = vld [vmem:[#allocation7 + $0xc0] sm:$0xf]
          %v2985 = vld [vmem:[#allocation7 + $0xc4] sm:$0xf]
          %v2986 = vld [vmem:[#allocation7 + $0xc8] sm:$0xf]
          %v2987 = vld [vmem:[#allocation7 + $0xcc] sm:$0xf]
          %v2988 = vld [vmem:[#allocation7 + $0xd0] sm:$0xf]
          %v2989 = vld [vmem:[#allocation7 + $0xd4] sm:$0xf]
          %v2990 = vld [vmem:[#allocation7 + $0xd8] sm:$0xf]
          %v2991 = vld [vmem:[#allocation7 + $0xdc] sm:$0xf]
          %v2992 = vld [vmem:[#allocation7 + $0xe0] sm:$0xf]
          %v2993 = vld [vmem:[#allocation7 + $0xe4] sm:$0xf]
          %v2994 = vld [vmem:[#allocation7 + $0xe8] sm:$0xf]
          %v2995 = vld [vmem:[#allocation7 + $0xec] sm:$0xf]
          %v2996 = vld [vmem:[#allocation7 + $0xf0] sm:$0xf]
          %v2997 = vld [vmem:[#allocation7 + $0xf4] sm:$0xf]
          %v2998 = vld [vmem:[#allocation7 + $0xf8] sm:$0xf]
          %v2999 = vld [vmem:[#allocation7 + $0xfc] sm:$0xf]
          %v3000 = vld [vmem:[%s5] sm:$0x1]
          %v3002 = vperm.slane %v3000, 0
          %v3068 = vunpack.c.l.b16 %v2936
          %v3069 = vunpack.c.l.b16 %v2937
          %v3070 = vunpack.c.l.b16 %v2938
          %v3071 = vunpack.c.l.b16 %v2939
          %v3072 = vunpack.c.l.b16 %v2940
          %v3073 = vunpack.c.l.b16 %v2941
          %v3074 = vunpack.c.l.b16 %v2942
          %v3075 = vunpack.c.l.b16 %v2943
          %v3076 = vunpack.c.l.b16 %v2944
          %v3077 = vunpack.c.l.b16 %v2945
          %v3078 = vunpack.c.l.b16 %v2946
          %v3079 = vunpack.c.l.b16 %v2947
          %v3080 = vunpack.c.l.b16 %v2948
          %v3081 = vunpack.c.l.b16 %v2949
          %v3082 = vunpack.c.l.b16 %v2950
          %v3083 = vunpack.c.l.b16 %v2951
          %v3084 = vunpack.c.l.b16 %v2952
          %v3085 = vunpack.c.l.b16 %v2953
          %v3086 = vunpack.c.l.b16 %v2954
          %v3087 = vunpack.c.l.b16 %v2955
          %v3088 = vunpack.c.l.b16 %v2956
          %v3089 = vunpack.c.l.b16 %v2957
          %v3090 = vunpack.c.l.b16 %v2958
          %v3091 = vunpack.c.l.b16 %v2959
          %v3092 = vunpack.c.l.b16 %v2960
          %v3093 = vunpack.c.l.b16 %v2961
          %v3094 = vunpack.c.l.b16 %v2962
          %v3095 = vunpack.c.l.b16 %v2963
          %v3096 = vunpack.c.l.b16 %v2964
          %v3097 = vunpack.c.l.b16 %v2965
          %v3098 = vunpack.c.l.b16 %v2966
          %v3099 = vunpack.c.l.b16 %v2967
          %v3100 = vunpack.c.l.b16 %v2968
          %v3101 = vunpack.c.l.b16 %v2969
          %v3102 = vunpack.c.l.b16 %v2970
          %v3103 = vunpack.c.l.b16 %v2971
          %v3104 = vunpack.c.l.b16 %v2972
          %v3105 = vunpack.c.l.b16 %v2973
          %v3106 = vunpack.c.l.b16 %v2974
          %v3107 = vunpack.c.l.b16 %v2975
          %v3108 = vunpack.c.l.b16 %v2976
          %v3109 = vunpack.c.l.b16 %v2977
          %v3110 = vunpack.c.l.b16 %v2978
          %v3111 = vunpack.c.l.b16 %v2979
          %v3112 = vunpack.c.l.b16 %v2980
          %v3113 = vunpack.c.l.b16 %v2981
          %v3114 = vunpack.c.l.b16 %v2982
          %v3115 = vunpack.c.l.b16 %v2983
          %v3116 = vunpack.c.l.b16 %v2984
          %v3117 = vunpack.c.l.b16 %v2985
          %v3118 = vunpack.c.l.b16 %v2986
          %v3119 = vunpack.c.l.b16 %v2987
          %v3120 = vunpack.c.l.b16 %v2988
          %v3121 = vunpack.c.l.b16 %v2989
          %v3122 = vunpack.c.l.b16 %v2990
          %v3123 = vunpack.c.l.b16 %v2991
          %v3124 = vunpack.c.l.b16 %v2992
          %v3125 = vunpack.c.l.b16 %v2993
          %v3126 = vunpack.c.l.b16 %v2994
          %v3127 = vunpack.c.l.b16 %v2995
          %v3128 = vunpack.c.l.b16 %v2996
          %v3129 = vunpack.c.l.b16 %v2997
          %v3130 = vunpack.c.l.b16 %v2998
          %v3131 = vunpack.c.l.b16 %v2999
          %v3132 = vpack.c.b16 %v3069, %v3068
          %v3133 = vpack.c.b16 %v3071, %v3070
          %v3134 = vpack.c.b16 %v3073, %v3072
          %v3135 = vpack.c.b16 %v3075, %v3074
          %v3136 = vpack.c.b16 %v3077, %v3076
          %v3137 = vpack.c.b16 %v3079, %v3078
          %v3138 = vpack.c.b16 %v3081, %v3080
          %v3139 = vpack.c.b16 %v3083, %v3082
          %v3140 = vpack.c.b16 %v3085, %v3084
          %v3141 = vpack.c.b16 %v3087, %v3086
          %v3142 = vpack.c.b16 %v3089, %v3088
          %v3143 = vpack.c.b16 %v3091, %v3090
          %v3144 = vpack.c.b16 %v3093, %v3092
          %v3145 = vpack.c.b16 %v3095, %v3094
          %v3146 = vpack.c.b16 %v3097, %v3096
          %v3147 = vpack.c.b16 %v3099, %v3098
          %v3148 = vpack.c.b16 %v3101, %v3100
          %v3149 = vpack.c.b16 %v3103, %v3102
          %v3150 = vpack.c.b16 %v3105, %v3104
          %v3151 = vpack.c.b16 %v3107, %v3106
          %v3152 = vpack.c.b16 %v3109, %v3108
          %v3153 = vpack.c.b16 %v3111, %v3110
          %v3154 = vpack.c.b16 %v3113, %v3112
          %v3155 = vpack.c.b16 %v3115, %v3114
          %v3156 = vpack.c.b16 %v3117, %v3116
          %v3157 = vpack.c.b16 %v3119, %v3118
          %v3158 = vpack.c.b16 %v3121, %v3120
          %v3159 = vpack.c.b16 %v3123, %v3122
          %v3160 = vpack.c.b16 %v3125, %v3124
          %v3161 = vpack.c.b16 %v3127, %v3126
          %v3162 = vpack.c.b16 %v3129, %v3128
          %v3163 = vpack.c.b16 %v3131, %v3130
          %3196 = vmatpush.bf16.msra.mxu0 %v3139
          %3197 = vmatpush.bf16.msra.mxu0 %v3138
          %3198 = vmatpush.bf16.msra.mxu0 %v3137
          %3199 = vmatpush.bf16.msra.mxu0 %v3136
          %3200 = vmatpush.bf16.msra.mxu0 %v3135
          %3201 = vmatpush.bf16.msra.mxu0 %v3134
          %3202 = vmatpush.bf16.msra.mxu0 %v3133
          %3203 = vmatpush.bf16.msra.mxu0 %v3132
          %3204 = vmatmul.bf16.gmra.mxu0 %v2932
          %v3205 = vpop.f32.mrf.mxu0
          %v3206 = vadd.f32 %v3002, %v3205
          %v3207 = vpop.f32.mrf.mxu0
          %3208 = vdwg.mxu0
          %3209 = vmatpush.bf16.msra.mxu0 %v3147
          %3210 = vmatpush.bf16.msra.mxu0 %v3146
          %3211 = vmatpush.bf16.msra.mxu0 %v3145
          %3212 = vmatpush.bf16.msra.mxu0 %v3144
          %3213 = vmatpush.bf16.msra.mxu0 %v3143
          %3214 = vmatpush.bf16.msra.mxu0 %v3142
          %3215 = vmatpush.bf16.msra.mxu0 %v3141
          %3216 = vmatpush.bf16.msra.mxu0 %v3140
          %3217 = vmatmul.bf16.gmra.mxu0 %v2933
          %v3218 = vpop.f32.mrf.mxu0
          %v3219 = vadd.f32 %v3206, %v3218
          %v3220 = vpop.f32.mrf.mxu0
          %3221 = vdwg.mxu0
          %3222 = vmatpush.bf16.msra.mxu0 %v3155
          %3223 = vmatpush.bf16.msra.mxu0 %v3154
          %3224 = vmatpush.bf16.msra.mxu0 %v3153
          %3225 = vmatpush.bf16.msra.mxu0 %v3152
          %3226 = vmatpush.bf16.msra.mxu0 %v3151
          %3227 = vmatpush.bf16.msra.mxu0 %v3150
          %3228 = vmatpush.bf16.msra.mxu0 %v3149
          %3229 = vmatpush.bf16.msra.mxu0 %v3148
          %3230 = vmatmul.bf16.gmra.mxu0 %v2934
          %v3231 = vpop.f32.mrf.mxu0
          %v3232 = vadd.f32 %v3219, %v3231
          %v3233 = vpop.f32.mrf.mxu0
          %3234 = vdwg.mxu0
          %3235 = vmatpush.bf16.msra.mxu0 %v3163
          %3236 = vmatpush.bf16.msra.mxu0 %v3162
          %3237 = vmatpush.bf16.msra.mxu0 %v3161
          %3238 = vmatpush.bf16.msra.mxu0 %v3160
          %3239 = vmatpush.bf16.msra.mxu0 %v3159
          %3240 = vmatpush.bf16.msra.mxu0 %v3158
          %3241 = vmatpush.bf16.msra.mxu0 %v3157
          %3242 = vmatpush.bf16.msra.mxu0 %v3156
          %3243 = vmatmul.bf16.gmra.mxu0 %v2935
          %v3244 = vpop.f32.mrf.mxu0
          %v3245 = vadd.f32 %v3232, %v3244
          %v3246 = vpop.f32.mrf.mxu0
          %3247 = vdwg.mxu0
          %3248 = vst [vmem:[#allocation9] sm:$0x3] %v3245
          %s3249 = scalar_lea.vmem [#allocation9], 2
          %3250 = vst [vmem:[%s3249 - $0x2] sm:$0xc] %v3245
        $region94: #{tpu_custom_call.1} parent=73 // pred_fallthru
          _
        // Predicated region
        $region95: #{tpu_custom_call.1} parent=73 // pred_check
          %p3251 = pneg %p183
        $region96: #{tpu_custom_call.1} parent=73 // pred_check_branch
          %3253 = sbr.rel (%p3251) target = $region98
        $region97: #{tpu_custom_call.1} parent=73 // pred_region
          %3255 = vsyncadd [#allocation6], 0
          %s3256 = smul.addr %s24, 2
          %s3257 = scalar_lea.hbm %s6, %s3256
          %s3258 = sshll.u32 [#allocation9], 4
          %s3259 = int_to_ptr.vmem [resolvable:$true] %s3258
          %s3260 = sshll.u32 %s3257, 4
          %s3261 = int_to_ptr.hbm [resolvable:$true] %s3260
          %3266 = dma.vmem_to_hbm [thread:$0]  %s3259, 64, %s3261, [#allocation6], 32, 32, 2
        $region98: #{tpu_custom_call.1} parent=73 // pred_fallthru
          _
        // Predicated region
        $region99: #{tpu_custom_call.1} parent=73 // pred_check
          %p3267 = pneg %p183
        $region100: #{tpu_custom_call.1} parent=73 // pred_check_branch
          %3269 = sbr.rel (%p3267) target = $region102
        $region101: #{tpu_custom_call.1} parent=73 // pred_region
          %3271 = dma.done [#allocation6], 64
        $region102: #{tpu_custom_call.1} parent=73 // pred_fallthru
          _
      $region74: #{tpu_custom_call.1} parent=5 // pred_fallthru
        _
      %p3272 = scmp.le.s32.totalorder 2, %s15
      // Predicated region
      $region103: #{tpu_custom_call.1} parent=5 // pred_check
        %p3273 = pneg %p3272
      $region104: #{tpu_custom_call.1} parent=5 // pred_check_branch
        %3275 = sbr.rel (%p3273) target = $region106
      $region105: #{tpu_custom_call.1} parent=5 // pred_region
        %s3276 = ssub.s32 %s15, 2
      $region106: #{tpu_custom_call.1} parent=5 // pred_fallthru
        _
    $region6: #{tpu_custom_call.1} parent=1 // loop_footer
      %s19 = sadd.s32 1, %s15
    $region7: #{tpu_custom_call.1} parent=1 // loop_footer_branch
      %14 = sbr.rel target = $region3
    $region8: #{tpu_custom_call.1} parent=1 // loop_exit
      _
    %3277 = vsyncpa [#allocation5], 1
    %s3278 = scalar_lea.sflag [#allocation5], 1
    %3279 = vsyncpa %s3278, 1
    %3280 = vsyncpa [#allocation8], 1
    %3281 = vsyncpa [#allocation6], 1
    %s3282 = scalar_lea.sflag [#allocation6], 1
    %3283 = vsyncpa %s3282, 1

</llo_original>
